<compile_context>
chip_gen: v7x
topology: tpu7x:2x2x1
jax: 0.10.0
libtpu: 0.0.40
codegen_flags: <defaults>
</compile_context>

<pallas_src>
import functools

import numpy as np
import jax
import jax.numpy as jnp
from jax import lax
from jax.experimental import pallas as pl
from jax.experimental.pallas import tpu as pltpu

_C1 = 16   # conv1 out channels (SMALL stack)
_C2 = 32   # conv2 out channels (SMALL stack)


# ----------------------------------------------------------------------------
# The fused forward-pass kernel
# ----------------------------------------------------------------------------
def _cnn_fused_kernel(x1_ref, w1_ref, b1_ref, mu_ref, md_ref,
                      w2_ref, b2_ref, v0_ref, b0_ref,
                      w1fc_ref, b1fc_ref, w2fc_ref, b2fc_ref,
                      out_ref,
                      halo_ref, s2_ref,
                      *, batch, side):
  f32 = jnp.float32
  bf16 = jnp.bfloat16
  c1, c2 = _C1, _C2
  H2 = side // 2
  H3 = side // 4
  n1 = batch * side            # conv1 output rows (even/odd-i permuted host-side)
  n2 = batch * H2              # pool1 / conv2 rows
  half1 = H2 * c1              # 128 lanes per j-parity block after conv1
  half2 = H3 * c2              # 128 lanes per j-parity block after conv2

  # ---- conv1 + bias + ReLU (one MXU matmul, bf16 in / f32 acc) --------------
  # Output columns: [even-j block | odd-j block]; output rows: [even-i | odd-i].
  z1 = jnp.dot(x1_ref[...], w1_ref[...], preferred_element_type=f32) + b1_ref[...]
  z1 = jnp.maximum(z1, 0.0)                                     # (n1, 2*half1)

  # ---- maxpool1 2x2/2: aligned row-half max (H) + lane-half max (W) ---------
  hmax1 = jnp.maximum(z1[0:n2, :], z1[n2:n1, :])                # (n2, 2*half1)
  pooled1 = jnp.maximum(hmax1[:, 0:half1], hmax1[:, half1:2 * half1])  # (n2, half1)

  # ---- conv2 + bias + ReLU (one MXU matmul, K = 3*half1) --------------------
  # Halo scratch gives the kh = -1/0/+1 row shifts; masks kill cross-image bleed.
  halo_ref[0:1, :] = jnp.zeros((1, half1), f32)
  halo_ref[n2 + 1:n2 + 2, :] = jnp.zeros((1, half1), f32)
  halo_ref[1:n2 + 1, :] = pooled1
  up = halo_ref[0:n2, :] * mu_ref[...]
  mid = halo_ref[1:n2 + 1, :]
  dn = halo_ref[2:n2 + 2, :] * md_ref[...]
  x2 = jnp.concatenate([up, mid, dn], axis=-1).astype(bf16)     # (n2, 3*half1)
  z2 = jnp.dot(x2, w2_ref[...], preferred_element_type=f32) + b2_ref[...]
  z2 = jnp.maximum(z2, 0.0)                                     # (n2, 2*half2)

  # ---- maxpool2 W-direction (aligned lane-half max), staged for row reads ---
  s2_ref[...] = jnp.maximum(z2[:, 0:half2], z2[:, half2:2 * half2])   # (n2, half2)

  # ---- maxpool2 H-direction + NCHW flatten gather --> (batch, H3*W3*c2) -----
  # Rows (b, 2*i3) / (b, 2*i3+1) are strided sublane reads; lanes stay dense.
  pieces = []
  for i3 in range(H3):
    ra = s2_ref[pl.ds(2 * i3, batch, stride=H2), :]             # (batch, half2)
    rb = s2_ref[pl.ds(2 * i3 + 1, batch, stride=H2), :]
    pieces.append(jnp.maximum(ra, rb))
  x0 = jnp.concatenate(pieces, axis=-1).astype(bf16)            # (batch, H3*half2)

  # ---- fc0 + ReLU, fc1 + ReLU, fc2 (Dropout is inference identity) ----------
  h0 = jnp.maximum(
      jnp.dot(x0, v0_ref[...], preferred_element_type=f32) + b0_ref[...], 0.0)
  h1 = jnp.maximum(
      jnp.dot(h0.astype(bf16), w1fc_ref[...], preferred_element_type=f32)
      + b1fc_ref[...], 0.0)
  logits = jnp.dot(h1.astype(bf16), w2fc_ref[...], preferred_element_type=f32) \
      + b2fc_ref[...]
  out_ref[...] = logits.astype(out_ref.dtype)                   # lane-dense (batch, 128)


# ----------------------------------------------------------------------------
# Host-side one-time weight / constant packing (no per-forward transposes)
# ----------------------------------------------------------------------------
def prepare_pack(params, *, side, batch, num_classes, hidden_dims=(128, 64)):
  c1, c2 = _C1, _C2
  assert side % 4 == 0, "SMALL stack packing requires side_length % 4 == 0"
  H2 = W2 = side // 2
  H3 = W3 = side // 4
  hid0, hid1 = hidden_dims
  f32 = np.float32

  w1 = np.asarray(params["conv1_w"], f32)          # (c1, 1, 3, 3)
  b1 = np.asarray(params["conv1_b"], f32)
  w2 = np.asarray(params["conv2_w"], f32)          # (c2, c1, 3, 3)
  b2 = np.asarray(params["conv2_b"], f32)
  W0 = np.asarray(params["fc0_w"], f32)            # (hid0, c2*H3*W3)
  assert W0.shape == (hid0, c2 * H3 * W3)

  # conv1 banded weight: rows = kh*(side+2)+p (padded im2col column),
  # cols = [even-j | odd-j] x (j2, c).  K padded to a multiple of 64.
  K1 = 3 * (side + 2)
  K1p = ((K1 + 63) // 64) * 64
  w1p = np.zeros((K1p, 2 * W2 * c1), f32)
  for parity in (0, 1):
    for j2 in range(W2):
      j = 2 * j2 + parity
      for c in range(c1):
        col = parity * (W2 * c1) + j2 * c1 + c
        for kh in range(3):
          for kw in range(3):
            w1p[kh * (side + 2) + j + kw, col] = w1[c, 0, kh, kw]
  b1p = np.zeros((1, 2 * W2 * c1), f32)
  for parity in (0, 1):
    for j2 in range(W2):
      base = parity * W2 * c1 + j2 * c1
      b1p[0, base:base + c1] = b1

  # conv2 banded weight: rows = kh*(W2*c1) + j2in*c1 + cin,
  # cols = [even-j2out | odd-j2out] x (j3, cout).  j-boundary padding is zero rows.
  w2p = np.zeros((3 * W2 * c1, 2 * W3 * c2), f32)
  for parity in (0, 1):
    for j3 in range(W3):
      j2out = 2 * j3 + parity
      for cout in range(c2):
        col = parity * (W3 * c2) + j3 * c2 + cout
        for kh in range(3):
          for kw in range(3):
            j2in = j2out + kw - 1
            if 0 <= j2in < W2:
              for cin in range(c1):
                w2p[kh * (W2 * c1) + j2in * c1 + cin, col] = w2[cout, cin, kh, kw]
  b2p = np.zeros((1, 2 * W3 * c2), f32)
  for parity in (0, 1):
    for j3 in range(W3):
      base = parity * W3 * c2 + j3 * c2
      b2p[0, base:base + c2] = b2

  # conv2 halo masks (kh direction): kill cross-image bleed at i2 = 0 / H2-1.
  n2 = batch * H2
  mu = np.zeros((n2, 1), f32)
  md = np.zeros((n2, 1), f32)
  for b in range(batch):
    for i2 in range(H2):
      mu[b * H2 + i2, 0] = 1.0 if i2 >= 1 else 0.0
      md[b * H2 + i2, 0] = 1.0 if i2 <= H2 - 2 else 0.0

  # fc0 weight repacked to the kernel's X0 layout: row = i3*(W3*c2) + j3*c2 + c,
  # absorbing the torch NCHW view(batch, -1) flatten (c*H3*W3 + i3*W3 + j3).
  v0p = np.zeros((H3 * W3 * c2, hid0), f32)
  for i3 in range(H3):
    for j3 in range(W3):
      for c in range(c2):
        v0p[i3 * (W3 * c2) + j3 * c2 + c, :] = W0[:, c * (H3 * W3) + i3 * W3 + j3]

  # fc2 padded to a 128-lane-dense output.
  ncp = max(128, ((num_classes + 127) // 128) * 128)
  w2fcp = np.zeros((hid1, ncp), f32)
  w2fcp[:, :num_classes] = np.asarray(params["fc2_w"], f32).T
  b2fcp = np.zeros((1, ncp), f32)
  b2fcp[0, :num_classes] = np.asarray(params["fc2_b"], f32)

  bf16 = jnp.bfloat16
  pack = dict(
      w1p=jnp.asarray(w1p, bf16),
      b1p=jnp.asarray(b1p),
      mu=jnp.asarray(mu),
      md=jnp.asarray(md),
      w2p=jnp.asarray(w2p, bf16),
      b2p=jnp.asarray(b2p),
      v0p=jnp.asarray(v0p, bf16),
      b0=jnp.asarray(np.asarray(params["fc0_b"], f32).reshape(1, hid0)),
      w1fc=jnp.asarray(np.asarray(params["fc1_w"], f32).T.copy(), bf16),
      b1fc=jnp.asarray(np.asarray(params["fc1_b"], f32).reshape(1, hid1)),
      w2fcp=jnp.asarray(w2fcp, bf16),
      b2fcp=jnp.asarray(b2fcp),
  )
  return pack


# ----------------------------------------------------------------------------
# Forward pass wrapper (single pallas_call)
# ----------------------------------------------------------------------------
def cnn_forward(x, pack, *, side, batch, num_classes):
  c1, c2 = _C1, _C2
  H2 = side // 2
  H3 = side // 4
  n1 = batch * side
  n2 = batch * H2
  padded_len = side * side
  K1 = 3 * (side + 2)
  K1p = pack["w1p"].shape[0]
  ncp = pack["w2fcp"].shape[1]

  bdim, in_dim = x.shape
  assert bdim == batch
  x = x.astype(jnp.float32)
  if in_dim < padded_len:                      # _reshape_input zero padding
    x = jnp.concatenate(
        [x, jnp.zeros((batch, padded_len - in_dim), jnp.float32)], axis=1)

  # Tiny host-side im2col of the single-channel image (a few KB of XLA glue):
  # one row per output pixel row (b, i); columns = the 3 zero-padded image rows
  # i-1, i, i+1 of width side+2.  Rows are permuted so even-i rows form the
  # first half (ordered (b, i//2)) -> maxpool1's H direction is an aligned
  # row-half max inside the kernel.
  img = x.reshape(batch, side, side)
  imgp = jnp.pad(img, ((0, 0), (1, 1), (1, 1)))
  x1 = jnp.concatenate([imgp[:, kh:kh + side, :] for kh in range(3)], axis=-1)
  x1 = x1.reshape(batch, H2, 2, K1).transpose(2, 0, 1, 3).reshape(n1, K1)
  if K1p > K1:
    x1 = jnp.pad(x1, ((0, 0), (0, K1p - K1)))
  x1 = x1.astype(jnp.bfloat16)

  operands = (x1, pack["w1p"], pack["b1p"], pack["mu"], pack["md"],
              pack["w2p"], pack["b2p"], pack["v0p"], pack["b0"],
              pack["w1fc"], pack["b1fc"], pack["w2fcp"], pack["b2fcp"])
  in_specs = [pl.BlockSpec(op.shape, lambda i: (0, 0)) for op in operands]

  kernel = functools.partial(_cnn_fused_kernel, batch=batch, side=side)
  # TODO(synk): at large batch, add a leading "parallel" grid axis over batch
  # tiles (v7x megacore + BlockSpec DMA/compute overlap) and size per-tile
  # scratch against v7x's 64 MiB VMEM; unnecessary at batch=2.
  padded = pl.pallas_call(
      kernel,
      out_shape=jax.ShapeDtypeStruct((batch, ncp), jnp.float32),
      grid=(1,),
      in_specs=in_specs,
      out_specs=pl.BlockSpec((batch, ncp), lambda i: (0, 0)),
      scratch_shapes=[
          pltpu.VMEM((n2 + 2, H2 * c1), jnp.float32),   # conv2 input halo
          pltpu.VMEM((n2, H3 * c2), jnp.float32),       # pool2 W-maxed rows
      ],
      compiler_params=pltpu.CompilerParams(
          dimension_semantics=("arbitrary",),
          vmem_limit_bytes=32 * 1024 * 1024),
  )(*operands)
  return padded[:, :num_classes]


# ----------------------------------------------------------------------------
# CNNModel parameters (deterministic synthetic init, PyTorch-layout shapes)
# ----------------------------------------------------------------------------
def init_params(key, input_dim, num_classes, hidden_dims=(128, 64)):
  side = int(np.ceil(np.sqrt(float(input_dim))))
  conv_out_dim = _C2 * (side // 4) * (side // 4)
  keys = jax.random.split(key, 10)
  p = {}
  p["conv1_w"] = 0.1 * jax.random.normal(keys[0], (_C1, 1, 3, 3), jnp.float32)
  p["conv1_b"] = 0.1 * jax.random.normal(keys[1], (_C1,), jnp.float32)
  p["conv2_w"] = 0.1 * jax.random.normal(keys[2], (_C2, _C1, 3, 3), jnp.float32)
  p["conv2_b"] = 0.1 * jax.random.normal(keys[3], (_C2,), jnp.float32)
  dims = [conv_out_dim] + list(hidden_dims) + [num_classes]
  for li in range(3):
    p[f"fc{li}_w"] = 0.05 * jax.random.normal(
        keys[4 + 2 * li], (dims[li + 1], dims[li]), jnp.float32)   # (out, in)
    p[f"fc{li}_b"] = 0.05 * jax.random.normal(
        keys[5 + 2 * li], (dims[li + 1],), jnp.float32)
  return p, side


# ----------------------------------------------------------------------------
# Pure-JAX reference of CNNModel.forward (for tolerance validation)
# ----------------------------------------------------------------------------
def reference_forward(x, params, *, side):
  batch = x.shape[0]
  padded_len = side * side
  x = x.astype(jnp.float32)
  if x.shape[1] < padded_len:
    x = jnp.concatenate(
        [x, jnp.zeros((batch, padded_len - x.shape[1]), jnp.float32)], axis=1)
  img = x.reshape(batch, 1, side, side)

  def conv_relu(v, w, b):
    y = lax.conv_general_dilated(v, w, (1, 1), [(1, 1), (1, 1)],
                                 dimension_numbers=("NCHW", "OIHW", "NCHW"))
    return jnp.maximum(y + b.reshape(1, -1, 1, 1), 0.0)

  def pool(v):
    return lax.reduce_window(v, -jnp.inf, lax.max,
                             (1, 1, 2, 2), (1, 1, 2, 2), "VALID")

  y = pool(conv_relu(img, params["conv1_w"], params["conv1_b"]))
  y = pool(conv_relu(y, params["conv2_w"], params["conv2_b"]))
  flat = y.reshape(batch, -1)
  h0 = jnp.maximum(flat @ params["fc0_w"].T + params["fc0_b"], 0.0)
  h1 = jnp.maximum(h0 @ params["fc1_w"].T + params["fc1_b"], 0.0)
  return h1 @ params["fc2_w"].T + params["fc2_b"]


# ----------------------------------------------------------------------------
if __name__ == "__main__":
  batch = 2
  input_dim = 256          # side_length = 16, conv_output_dim = 32*4*4 = 512
  num_classes = 8
  hidden_dims = (128, 64)

  key = jax.random.PRNGKey(0)
  pkey, xkey = jax.random.split(key)
  params, side = init_params(pkey, input_dim, num_classes, hidden_dims)
  pack = prepare_pack(params, side=side, batch=batch,
                      num_classes=num_classes, hidden_dims=hidden_dims)
  x = jax.random.normal(xkey, (batch, input_dim), jnp.float32)

  fwd = jax.jit(functools.partial(cnn_forward, side=side, batch=batch,
                                  num_classes=num_classes))
  logits = fwd(x, pack)
  jax.block_until_ready(logits)
  assert logits.shape == (batch, num_classes), logits.shape

  # bf16 weights / bf16 MXU passes: validate against the f32 reference with a
  # tolerance, not exact equality.
  ref = reference_forward(x, params, side=side)
  np.testing.assert_allclose(np.asarray(logits), np.asarray(ref),
                             rtol=5e-2, atol=5e-2)
  print("KERNEL_OK")
</pallas_src>

<mosaic_0001>
module attributes {stable_mosaic.version = 11 : i64} {
  func.func @_cnn_fused_kernel(%arg0: i32, %arg1: memref<32x64xbf16, #tpu.memory_space<vmem>>, %arg2: memref<64x256xbf16, #tpu.memory_space<vmem>>, %arg3: memref<1x256xf32, #tpu.memory_space<vmem>>, %arg4: memref<16x1xf32, #tpu.memory_space<vmem>>, %arg5: memref<16x1xf32, #tpu.memory_space<vmem>>, %arg6: memref<384x256xbf16, #tpu.memory_space<vmem>>, %arg7: memref<1x256xf32, #tpu.memory_space<vmem>>, %arg8: memref<512x128xbf16, #tpu.memory_space<vmem>>, %arg9: memref<1x128xf32, #tpu.memory_space<vmem>>, %arg10: memref<128x64xbf16, #tpu.memory_space<vmem>>, %arg11: memref<1x64xf32, #tpu.memory_space<vmem>>, %arg12: memref<64x128xbf16, #tpu.memory_space<vmem>>, %arg13: memref<1x128xf32, #tpu.memory_space<vmem>>, %arg14: memref<2x128xf32, #tpu.memory_space<vmem>>, %arg15: memref<18x128xf32, #tpu.memory_space<vmem>>, %arg16: memref<16x128xf32, #tpu.memory_space<vmem>>) attributes {dimension_semantics = [#tpu.dimension_semantics<arbitrary>], iteration_bounds = array<i64: 1>, scalar_prefetch = 0 : i64, scratch_operands = 2 : i64, tpu.core_type = #tpu.core_type<tc>, window_params = [{pipeline_mode = #tpu.pipeline_mode<synchronous>, transform_indices = @transform_0, window_bounds = array<i64: 32, 64>}, {pipeline_mode = #tpu.pipeline_mode<synchronous>, transform_indices = @transform_1, window_bounds = array<i64: 64, 256>}, {pipeline_mode = #tpu.pipeline_mode<synchronous>, transform_indices = @transform_2, window_bounds = array<i64: 1, 256>}, {pipeline_mode = #tpu.pipeline_mode<synchronous>, transform_indices = @transform_3, window_bounds = array<i64: 16, 1>}, {pipeline_mode = #tpu.pipeline_mode<synchronous>, transform_indices = @transform_4, window_bounds = array<i64: 16, 1>}, {pipeline_mode = #tpu.pipeline_mode<synchronous>, transform_indices = @transform_5, window_bounds = array<i64: 384, 256>}, {pipeline_mode = #tpu.pipeline_mode<synchronous>, transform_indices = @transform_6, window_bounds = array<i64: 1, 256>}, {pipeline_mode = #tpu.pipeline_mode<synchronous>, transform_indices = @transform_7, window_bounds = array<i64: 512, 128>}, {pipeline_mode = #tpu.pipeline_mode<synchronous>, transform_indices = @transform_8, window_bounds = array<i64: 1, 128>}, {pipeline_mode = #tpu.pipeline_mode<synchronous>, transform_indices = @transform_9, window_bounds = array<i64: 128, 64>}, {pipeline_mode = #tpu.pipeline_mode<synchronous>, transform_indices = @transform_10, window_bounds = array<i64: 1, 64>}, {pipeline_mode = #tpu.pipeline_mode<synchronous>, transform_indices = @transform_11, window_bounds = array<i64: 64, 128>}, {pipeline_mode = #tpu.pipeline_mode<synchronous>, transform_indices = @transform_12, window_bounds = array<i64: 1, 128>}, {pipeline_mode = #tpu.pipeline_mode<synchronous>, transform_indices = @transform_13, window_bounds = array<i64: 2, 128>}]} {
    %c0 = arith.constant 0 : index
    %c0_0 = arith.constant 0 : index
    %0 = vector.load %arg1[%c0, %c0_0] : memref<32x64xbf16, #tpu.memory_space<vmem>>, vector<32x64xbf16>
    %c0_1 = arith.constant 0 : index
    %c0_2 = arith.constant 0 : index
    %1 = vector.load %arg2[%c0_1, %c0_2] : memref<64x256xbf16, #tpu.memory_space<vmem>>, vector<64x256xbf16>
    %cst = arith.constant dense<0.000000e+00> : vector<32x256xf32>
    %2 = tpu.matmul %0, %1, %cst {dimension_numbers = #tpu.dot_dimension_numbers<[1], [0], [0], [1], [0, 0, 1, 1], [], []>} : vector<32x64xbf16>, vector<64x256xbf16>, vector<32x256xf32> -> vector<32x256xf32>
    %c0_3 = arith.constant 0 : index
    %c0_4 = arith.constant 0 : index
    %3 = vector.load %arg3[%c0_3, %c0_4] : memref<1x256xf32, #tpu.memory_space<vmem>>, vector<1x256xf32>
    %4 = vector.broadcast %3 : vector<1x256xf32> to vector<32x256xf32>
    %5 = arith.addf %2, %4 : vector<32x256xf32>
    %cst_5 = arith.constant 0.000000e+00 : f32
    %6 = vector.broadcast %cst_5 : f32 to vector<32x256xf32>
    %7 = arith.maximumf %5, %6 : vector<32x256xf32>
    %8 = vector.extract_strided_slice %7 {offsets = [0, 0], sizes = [16, 256], strides = [1, 1]} : vector<32x256xf32> to vector<16x256xf32>
    %9 = vector.extract_strided_slice %7 {offsets = [16, 0], sizes = [16, 256], strides = [1, 1]} : vector<32x256xf32> to vector<16x256xf32>
    %10 = arith.maximumf %8, %9 : vector<16x256xf32>
    %11 = vector.extract_strided_slice %10 {offsets = [0, 0], sizes = [16, 128], strides = [1, 1]} : vector<16x256xf32> to vector<16x128xf32>
    %12 = vector.extract_strided_slice %10 {offsets = [0, 128], sizes = [16, 128], strides = [1, 1]} : vector<16x256xf32> to vector<16x128xf32>
    %13 = arith.maximumf %11, %12 : vector<16x128xf32>
    %cst_6 = arith.constant 0.000000e+00 : f32
    %14 = vector.broadcast %cst_6 : f32 to vector<1x128xf32>
    %c0_7 = arith.constant 0 : index
    %c0_8 = arith.constant 0 : index
    %15 = vector.load %arg15[%c0_7, %c0_8] : memref<18x128xf32, #tpu.memory_space<vmem>>, vector<1x128xf32>
    tpu.vector_store %arg15[%c0_7, %c0_8], %14 {strides = array<i32>} : memref<18x128xf32, #tpu.memory_space<vmem>>, vector<1x128xf32>,
    %cst_9 = arith.constant 0.000000e+00 : f32
    %16 = vector.broadcast %cst_9 : f32 to vector<1x128xf32>
    %c17 = arith.constant 17 : index
    %c0_10 = arith.constant 0 : index
    %17 = vector.load %arg15[%c17, %c0_10] : memref<18x128xf32, #tpu.memory_space<vmem>>, vector<1x128xf32>
    tpu.vector_store %arg15[%c17, %c0_10], %16 {strides = array<i32>} : memref<18x128xf32, #tpu.memory_space<vmem>>, vector<1x128xf32>,
    %c1 = arith.constant 1 : index
    %c0_11 = arith.constant 0 : index
    %18 = vector.load %arg15[%c1, %c0_11] : memref<18x128xf32, #tpu.memory_space<vmem>>, vector<16x128xf32>
    tpu.vector_store %arg15[%c1, %c0_11], %13 {strides = array<i32>} : memref<18x128xf32, #tpu.memory_space<vmem>>, vector<16x128xf32>,
    %c0_12 = arith.constant 0 : index
    %c0_13 = arith.constant 0 : index
    %19 = vector.load %arg15[%c0_12, %c0_13] : memref<18x128xf32, #tpu.memory_space<vmem>>, vector<16x128xf32>
    %c0_14 = arith.constant 0 : index
    %c0_15 = arith.constant 0 : index
    %20 = vector.load %arg4[%c0_14, %c0_15] : memref<16x1xf32, #tpu.memory_space<vmem>>, vector<16x1xf32>
    %21 = vector.broadcast %20 : vector<16x1xf32> to vector<16x128xf32>
    %22 = arith.mulf %19, %21 : vector<16x128xf32>
    %c1_16 = arith.constant 1 : index
    %c0_17 = arith.constant 0 : index
    %23 = vector.load %arg15[%c1_16, %c0_17] : memref<18x128xf32, #tpu.memory_space<vmem>>, vector<16x128xf32>
    %c2 = arith.constant 2 : index
    %c0_18 = arith.constant 0 : index
    %24 = vector.load %arg15[%c2, %c0_18] : memref<18x128xf32, #tpu.memory_space<vmem>>, vector<16x128xf32>
    %c0_19 = arith.constant 0 : index
    %c0_20 = arith.constant 0 : index
    %25 = vector.load %arg5[%c0_19, %c0_20] : memref<16x1xf32, #tpu.memory_space<vmem>>, vector<16x1xf32>
    %26 = vector.broadcast %25 : vector<16x1xf32> to vector<16x128xf32>
    %27 = arith.mulf %24, %26 : vector<16x128xf32>
    %28 = tpu.concatenate %22, %23, %27 in 1 : vector<16x128xf32>, vector<16x128xf32>, vector<16x128xf32> -> vector<16x384xf32>
    %29 = arith.truncf %28 : vector<16x384xf32> to vector<16x384xbf16>
    %c0_21 = arith.constant 0 : index
    %c0_22 = arith.constant 0 : index
    %30 = vector.load %arg6[%c0_21, %c0_22] : memref<384x256xbf16, #tpu.memory_space<vmem>>, vector<384x256xbf16>
    %cst_23 = arith.constant dense<0.000000e+00> : vector<16x256xf32>
    %31 = tpu.matmul %29, %30, %cst_23 {dimension_numbers = #tpu.dot_dimension_numbers<[1], [0], [0], [1], [0, 0, 1, 1], [], []>} : vector<16x384xbf16>, vector<384x256xbf16>, vector<16x256xf32> -> vector<16x256xf32>
    %c0_24 = arith.constant 0 : index
    %c0_25 = arith.constant 0 : index
    %32 = vector.load %arg7[%c0_24, %c0_25] : memref<1x256xf32, #tpu.memory_space<vmem>>, vector<1x256xf32>
    %33 = vector.broadcast %32 : vector<1x256xf32> to vector<16x256xf32>
    %34 = arith.addf %31, %33 : vector<16x256xf32>
    %cst_26 = arith.constant 0.000000e+00 : f32
    %35 = vector.broadcast %cst_26 : f32 to vector<16x256xf32>
    %36 = arith.maximumf %34, %35 : vector<16x256xf32>
    %37 = vector.extract_strided_slice %36 {offsets = [0, 0], sizes = [16, 128], strides = [1, 1]} : vector<16x256xf32> to vector<16x128xf32>
    %38 = vector.extract_strided_slice %36 {offsets = [0, 128], sizes = [16, 128], strides = [1, 1]} : vector<16x256xf32> to vector<16x128xf32>
    %39 = arith.maximumf %37, %38 : vector<16x128xf32>
    %c0_27 = arith.constant 0 : index
    %c0_28 = arith.constant 0 : index
    %40 = vector.load %arg16[%c0_27, %c0_28] : memref<16x128xf32, #tpu.memory_space<vmem>>, vector<16x128xf32>
    tpu.vector_store %arg16[%c0_27, %c0_28], %39 {strides = array<i32>} : memref<16x128xf32, #tpu.memory_space<vmem>>, vector<16x128xf32>,
    %c0_29 = arith.constant 0 : index
    %c0_30 = arith.constant 0 : index
    %41 = tpu.strided_load %arg16[%c0_29, %c0_30] {strides = array<i32: 8, 1>} : memref<16x128xf32, #tpu.memory_space<vmem>>, vector<2x128xf32>
    %c1_31 = arith.constant 1 : index
    %c0_32 = arith.constant 0 : index
    %42 = tpu.strided_load %arg16[%c1_31, %c0_32] {strides = array<i32: 8, 1>} : memref<16x128xf32, #tpu.memory_space<vmem>>, vector<2x128xf32>
    %43 = arith.maximumf %41, %42 : vector<2x128xf32>
    %c2_33 = arith.constant 2 : index
    %c0_34 = arith.constant 0 : index
    %44 = tpu.strided_load %arg16[%c2_33, %c0_34] {strides = array<i32: 8, 1>} : memref<16x128xf32, #tpu.memory_space<vmem>>, vector<2x128xf32>
    %c3 = arith.constant 3 : index
    %c0_35 = arith.constant 0 : index
    %45 = tpu.strided_load %arg16[%c3, %c0_35] {strides = array<i32: 8, 1>} : memref<16x128xf32, #tpu.memory_space<vmem>>, vector<2x128xf32>
    %46 = arith.maximumf %44, %45 : vector<2x128xf32>
    %c4 = arith.constant 4 : index
    %c0_36 = arith.constant 0 : index
    %47 = tpu.strided_load %arg16[%c4, %c0_36] {strides = array<i32: 8, 1>} : memref<16x128xf32, #tpu.memory_space<vmem>>, vector<2x128xf32>
    %c5 = arith.constant 5 : index
    %c0_37 = arith.constant 0 : index
    %48 = tpu.strided_load %arg16[%c5, %c0_37] {strides = array<i32: 8, 1>} : memref<16x128xf32, #tpu.memory_space<vmem>>, vector<2x128xf32>
    %49 = arith.maximumf %47, %48 : vector<2x128xf32>
    %c6 = arith.constant 6 : index
    %c0_38 = arith.constant 0 : index
    %50 = tpu.strided_load %arg16[%c6, %c0_38] {strides = array<i32: 8, 1>} : memref<16x128xf32, #tpu.memory_space<vmem>>, vector<2x128xf32>
    %c7 = arith.constant 7 : index
    %c0_39 = arith.constant 0 : index
    %51 = tpu.strided_load %arg16[%c7, %c0_39] {strides = array<i32: 8, 1>} : memref<16x128xf32, #tpu.memory_space<vmem>>, vector<2x128xf32>
    %52 = arith.maximumf %50, %51 : vector<2x128xf32>
    %53 = tpu.concatenate %43, %46, %49, %52 in 1 : vector<2x128xf32>, vector<2x128xf32>, vector<2x128xf32>, vector<2x128xf32> -> vector<2x512xf32>
    %54 = arith.truncf %53 : vector<2x512xf32> to vector<2x512xbf16>
    %c0_40 = arith.constant 0 : index
    %c0_41 = arith.constant 0 : index
    %55 = vector.load %arg8[%c0_40, %c0_41] : memref<512x128xbf16, #tpu.memory_space<vmem>>, vector<512x128xbf16>
    %cst_42 = arith.constant dense<0.000000e+00> : vector<2x128xf32>
    %56 = tpu.matmul %54, %55, %cst_42 {dimension_numbers = #tpu.dot_dimension_numbers<[1], [0], [0], [1], [0, 0, 1, 1], [], []>} : vector<2x512xbf16>, vector<512x128xbf16>, vector<2x128xf32> -> vector<2x128xf32>
    %c0_43 = arith.constant 0 : index
    %c0_44 = arith.constant 0 : index
    %57 = vector.load %arg9[%c0_43, %c0_44] : memref<1x128xf32, #tpu.memory_space<vmem>>, vector<1x128xf32>
    %58 = vector.broadcast %57 : vector<1x128xf32> to vector<2x128xf32>
    %59 = arith.addf %56, %58 : vector<2x128xf32>
    %cst_45 = arith.constant 0.000000e+00 : f32
    %60 = vector.broadcast %cst_45 : f32 to vector<2x128xf32>
    %61 = arith.maximumf %59, %60 : vector<2x128xf32>
    %62 = arith.truncf %61 : vector<2x128xf32> to vector<2x128xbf16>
    %c0_46 = arith.constant 0 : index
    %c0_47 = arith.constant 0 : index
    %63 = vector.load %arg10[%c0_46, %c0_47] : memref<128x64xbf16, #tpu.memory_space<vmem>>, vector<128x64xbf16>
    %cst_48 = arith.constant dense<0.000000e+00> : vector<2x64xf32>
    %64 = tpu.matmul %62, %63, %cst_48 {dimension_numbers = #tpu.dot_dimension_numbers<[1], [0], [0], [1], [0, 0, 1, 1], [], []>} : vector<2x128xbf16>, vector<128x64xbf16>, vector<2x64xf32> -> vector<2x64xf32>
    %c0_49 = arith.constant 0 : index
    %c0_50 = arith.constant 0 : index
    %65 = vector.load %arg11[%c0_49, %c0_50] : memref<1x64xf32, #tpu.memory_space<vmem>>, vector<1x64xf32>
    %66 = vector.broadcast %65 : vector<1x64xf32> to vector<2x64xf32>
    %67 = arith.addf %64, %66 : vector<2x64xf32>
    %cst_51 = arith.constant 0.000000e+00 : f32
    %68 = vector.broadcast %cst_51 : f32 to vector<2x64xf32>
    %69 = arith.maximumf %67, %68 : vector<2x64xf32>
    %70 = arith.truncf %69 : vector<2x64xf32> to vector<2x64xbf16>
    %c0_52 = arith.constant 0 : index
    %c0_53 = arith.constant 0 : index
    %71 = vector.load %arg12[%c0_52, %c0_53] : memref<64x128xbf16, #tpu.memory_space<vmem>>, vector<64x128xbf16>
    %cst_54 = arith.constant dense<0.000000e+00> : vector<2x128xf32>
    %72 = tpu.matmul %70, %71, %cst_54 {dimension_numbers = #tpu.dot_dimension_numbers<[1], [0], [0], [1], [0, 0, 1, 1], [], []>} : vector<2x64xbf16>, vector<64x128xbf16>, vector<2x128xf32> -> vector<2x128xf32>
    %c0_55 = arith.constant 0 : index
    %c0_56 = arith.constant 0 : index
    %73 = vector.load %arg13[%c0_55, %c0_56] : memref<1x128xf32, #tpu.memory_space<vmem>>, vector<1x128xf32>
    %74 = vector.broadcast %73 : vector<1x128xf32> to vector<2x128xf32>
    %75 = arith.addf %72, %74 : vector<2x128xf32>
    %c0_57 = arith.constant 0 : index
    %c0_58 = arith.constant 0 : index
    %76 = vector.load %arg14[%c0_57, %c0_58] : memref<2x128xf32, #tpu.memory_space<vmem>>, vector<2x128xf32>
    tpu.vector_store %arg14[%c0_57, %c0_58], %75 {strides = array<i32>} : memref<2x128xf32, #tpu.memory_space<vmem>>, vector<2x128xf32>,
    return
  }
  func.func @transform_0(%arg0: i32) -> (i32, i32) {
    %c0_i32 = arith.constant 0 : i32
    %c0_i32_0 = arith.constant 0 : i32
    %c0_i32_1 = arith.constant 0 : i32
    return %c0_i32, %c0_i32_0 : i32, i32
  }
  func.func @transform_1(%arg0: i32) -> (i32, i32) {
    %c0_i32 = arith.constant 0 : i32
    %c0_i32_0 = arith.constant 0 : i32
    %c0_i32_1 = arith.constant 0 : i32
    return %c0_i32, %c0_i32_0 : i32, i32
  }
  func.func @transform_2(%arg0: i32) -> (i32, i32) {
    %c0_i32 = arith.constant 0 : i32
    %c0_i32_0 = arith.constant 0 : i32
    %c0_i32_1 = arith.constant 0 : i32
    return %c0_i32, %c0_i32_0 : i32, i32
  }
  func.func @transform_3(%arg0: i32) -> (i32, i32) {
    %c0_i32 = arith.constant 0 : i32
    %c0_i32_0 = arith.constant 0 : i32
    %c0_i32_1 = arith.constant 0 : i32
    return %c0_i32, %c0_i32_0 : i32, i32
  }
  func.func @transform_4(%arg0: i32) -> (i32, i32) {
    %c0_i32 = arith.constant 0 : i32
    %c0_i32_0 = arith.constant 0 : i32
    %c0_i32_1 = arith.constant 0 : i32
    return %c0_i32, %c0_i32_0 : i32, i32
  }
  func.func @transform_5(%arg0: i32) -> (i32, i32) {
    %c0_i32 = arith.constant 0 : i32
    %c0_i32_0 = arith.constant 0 : i32
    %c0_i32_1 = arith.constant 0 : i32
    return %c0_i32, %c0_i32_0 : i32, i32
  }
  func.func @transform_6(%arg0: i32) -> (i32, i32) {
    %c0_i32 = arith.constant 0 : i32
    %c0_i32_0 = arith.constant 0 : i32
    %c0_i32_1 = arith.constant 0 : i32
    return %c0_i32, %c0_i32_0 : i32, i32
  }
  func.func @transform_7(%arg0: i32) -> (i32, i32) {
    %c0_i32 = arith.constant 0 : i32
    %c0_i32_0 = arith.constant 0 : i32
    %c0_i32_1 = arith.constant 0 : i32
    return %c0_i32, %c0_i32_0 : i32, i32
  }
  func.func @transform_8(%arg0: i32) -> (i32, i32) {
    %c0_i32 = arith.constant 0 : i32
    %c0_i32_0 = arith.constant 0 : i32
    %c0_i32_1 = arith.constant 0 : i32
    return %c0_i32, %c0_i32_0 : i32, i32
  }
  func.func @transform_9(%arg0: i32) -> (i32, i32) {
    %c0_i32 = arith.constant 0 : i32
    %c0_i32_0 = arith.constant 0 : i32
    %c0_i32_1 = arith.constant 0 : i32
    return %c0_i32, %c0_i32_0 : i32, i32
  }
  func.func @transform_10(%arg0: i32) -> (i32, i32) {
    %c0_i32 = arith.constant 0 : i32
    %c0_i32_0 = arith.constant 0 : i32
    %c0_i32_1 = arith.constant 0 : i32
    return %c0_i32, %c0_i32_0 : i32, i32
  }
  func.func @transform_11(%arg0: i32) -> (i32, i32) {
    %c0_i32 = arith.constant 0 : i32
    %c0_i32_0 = arith.constant 0 : i32
    %c0_i32_1 = arith.constant 0 : i32
    return %c0_i32, %c0_i32_0 : i32, i32
  }
  func.func @transform_12(%arg0: i32) -> (i32, i32) {
    %c0_i32 = arith.constant 0 : i32
    %c0_i32_0 = arith.constant 0 : i32
    %c0_i32_1 = arith.constant 0 : i32
    return %c0_i32, %c0_i32_0 : i32, i32
  }
  func.func @transform_13(%arg0: i32) -> (i32, i32) {
    %c0_i32 = arith.constant 0 : i32
    %c0_i32_0 = arith.constant 0 : i32
    %c0_i32_1 = arith.constant 0 : i32
    return %c0_i32, %c0_i32_0 : i32, i32
  }
}

</mosaic_0001>

<llo_original>
// kernel: cnn_forward.1
$region0: #{cnn_forward.1}
  #allocation0 [shape = 'u32[]', space=smem, size = 0x4, offset = 0x4, fixed_abs, tag = 'smem constant byte address 0x4 - core index']
  #allocation1 [shape = 'u32[144,128]{1,0:T(1,128)}', space=vmem, size = 0x12000, scoped, tag = 'internal scratch']
  #allocation2 [shape = 'f32[18,128]{1,0:T(8,128)}', space=vmem, size = 0x3000, scoped, tag = 'scratch operand']
  #allocation3 [shape = 'f32[16,128]{1,0:T(8,128)}', space=vmem, size = 0x2000, scoped, tag = 'scratch operand']
  %s0 = inlined_call_operand.vmem [shape: bf16[32,64], index: 0, kind: input, shape index: {}]
  %s1 = inlined_call_operand.vmem [shape: bf16[64,256], index: 1, kind: input, shape index: {}]
  %s2 = inlined_call_operand.vmem [shape: f32[1,256], index: 2, kind: input, shape index: {}]
  %s3 = inlined_call_operand.vmem [shape: f32[16,1], index: 3, kind: input, shape index: {}]
  %s4 = inlined_call_operand.vmem [shape: f32[16,1], index: 4, kind: input, shape index: {}]
  %s5 = inlined_call_operand.vmem [shape: bf16[384,256], index: 5, kind: input, shape index: {}]
  %s6 = inlined_call_operand.vmem [shape: f32[1,256], index: 6, kind: input, shape index: {}]
  %s7 = inlined_call_operand.hbm [shape: bf16[512,128], index: 7, kind: input, shape index: {}]
  %s8 = inlined_call_operand.vmem [shape: f32[1,128], index: 8, kind: input, shape index: {}]
  %s9 = inlined_call_operand.vmem [shape: bf16[128,64], index: 9, kind: input, shape index: {}]
  %s10 = inlined_call_operand.vmem [shape: f32[1,64], index: 10, kind: input, shape index: {}]
  %s11 = inlined_call_operand.hbm [shape: bf16[64,128], index: 11, kind: input, shape index: {}]
  %s12 = inlined_call_operand.vmem [shape: f32[1,128], index: 12, kind: input, shape index: {}]
  %s13 = inlined_call_operand.hbm [shape: f32[2,128], index: 13, kind: output, shape index: {}]
  %s14 = sld [smem:[#allocation0]]
  $region70: #{cnn_forward.1} parent=0
    _
  %s16 = ssub.s32 1, %s14
  %s17 = scalar_select 0, %s16, %s14
  $region1: #{cnn_forward.1} parent=0
    #allocation4 [shape = 'u8[131072]{0}', space=vmem, size = 0x20000, scoped, tag = 'input window, operand 7, single buffered']
    #allocation5 [shape = 's32[1]{0}', space=sflag, size = 0x4, scoped, tag = 'scoped memory for cnn_forward.1']
    #allocation6 [shape = 's32[1]{0}', space=sflag, size = 0x4, scoped, tag = 'scoped memory for cnn_forward.1']
    #allocation7 [shape = 'u8[16384]{0}', space=vmem, size = 0x4000, scoped, tag = 'input window, operand 11, single buffered']
    #allocation8 [shape = 's32[1]{0}', space=sflag, size = 0x4, scoped, tag = 'scoped memory for cnn_forward.1']
    #allocation9 [shape = 'u8[1024]{0}', space=vmem, size = 0x400, scoped, tag = 'output window, operand 0, single buffered']
    %18 = vsyncpa [#allocation5], 0
    %19 = vsyncpa [#allocation8], 0
    %20 = vsyncpa [#allocation6], 0
    // Predicated region
    $region2: #{cnn_forward.1} parent=1 // pred_check
      _
    $region3: #{cnn_forward.1} parent=1 // pred_check_branch
      %22 = sbr.rel (0) target = $region5
    $region4: #{cnn_forward.1} parent=1 // pred_region
      _
    $region5: #{cnn_forward.1} parent=1 // pred_fallthru
      _
    // Predicated region
    $region6: #{cnn_forward.1} parent=1 // pred_check
      _
    $region7: #{cnn_forward.1} parent=1 // pred_check_branch
      %24 = sbr.rel (0) target = $region9
    $region8: #{cnn_forward.1} parent=1 // pred_region
      _
    $region9: #{cnn_forward.1} parent=1 // pred_fallthru
      _
    // Predicated region
    $region10: #{cnn_forward.1} parent=1 // pred_check
      _
    $region11: #{cnn_forward.1} parent=1 // pred_check_branch
      %26 = sbr.rel (0) target = $region13
    $region12: #{cnn_forward.1} parent=1 // pred_region
      _
    $region13: #{cnn_forward.1} parent=1 // pred_fallthru
      _
    // Predicated region
    $region14: #{cnn_forward.1} parent=1 // pred_check
      _
    $region15: #{cnn_forward.1} parent=1 // pred_check_branch
      %28 = sbr.rel (0) target = $region17
    $region16: #{cnn_forward.1} parent=1 // pred_region
      _
    $region17: #{cnn_forward.1} parent=1 // pred_fallthru
      _
    // Predicated region
    $region18: #{cnn_forward.1} parent=1 // pred_check
      _
    $region19: #{cnn_forward.1} parent=1 // pred_check_branch
      %30 = sbr.rel (0) target = $region21
    $region20: #{cnn_forward.1} parent=1 // pred_region
      _
    $region21: #{cnn_forward.1} parent=1 // pred_fallthru
      _
    // Predicated region
    $region22: #{cnn_forward.1} parent=1 // pred_check
      _
    $region23: #{cnn_forward.1} parent=1 // pred_check_branch
      %32 = sbr.rel (0) target = $region25
    $region24: #{cnn_forward.1} parent=1 // pred_region
      _
    $region25: #{cnn_forward.1} parent=1 // pred_fallthru
      _
    // Predicated region
    $region26: #{cnn_forward.1} parent=1 // pred_check
      _
    $region27: #{cnn_forward.1} parent=1 // pred_check_branch
      %34 = sbr.rel (0) target = $region29
    $region28: #{cnn_forward.1} parent=1 // pred_region
      _
    $region29: #{cnn_forward.1} parent=1 // pred_fallthru
      _
    // Predicated region
    $region30: #{cnn_forward.1} parent=1 // pred_check
      _
    $region31: #{cnn_forward.1} parent=1 // pred_check_branch
      %36 = sbr.rel (0) target = $region33
    $region32: #{cnn_forward.1} parent=1 // pred_region
      %s38 = ssub.s32 4096, 4096
      %39 = vsyncadd [#allocation5], %s38
      %s40 = sshll.u32 [#allocation4], 4
      %s41 = int_to_ptr.vmem [resolvable:$true] %s40
      %46 = dma.hbm_to_vmem [thread:$0]  %s7, 4096, %s41, [#allocation5], 64, 64, 4
    $region33: #{cnn_forward.1} parent=1 // pred_fallthru
      _
    // Predicated region
    $region34: #{cnn_forward.1} parent=1 // pred_check
      _
    $region35: #{cnn_forward.1} parent=1 // pred_check_branch
      %48 = sbr.rel (0) target = $region37
    $region36: #{cnn_forward.1} parent=1 // pred_region
      _
    $region37: #{cnn_forward.1} parent=1 // pred_fallthru
      _
    // Predicated region
    $region38: #{cnn_forward.1} parent=1 // pred_check
      _
    $region39: #{cnn_forward.1} parent=1 // pred_check_branch
      %50 = sbr.rel (0) target = $region41
    $region40: #{cnn_forward.1} parent=1 // pred_region
      _
    $region41: #{cnn_forward.1} parent=1 // pred_fallthru
      _
    // Predicated region
    $region42: #{cnn_forward.1} parent=1 // pred_check
      _
    $region43: #{cnn_forward.1} parent=1 // pred_check_branch
      %52 = sbr.rel (0) target = $region45
    $region44: #{cnn_forward.1} parent=1 // pred_region
      _
    $region45: #{cnn_forward.1} parent=1 // pred_fallthru
      _
    // Predicated region
    $region46: #{cnn_forward.1} parent=1 // pred_check
      _
    $region47: #{cnn_forward.1} parent=1 // pred_check_branch
      %54 = sbr.rel (0) target = $region49
    $region48: #{cnn_forward.1} parent=1 // pred_region
      %s56 = ssub.s32 512, 512
      %57 = vsyncadd [#allocation8], %s56
      %s58 = sshll.u32 [#allocation7], 4
      %s59 = int_to_ptr.vmem [resolvable:$true] %s58
      %64 = dma.hbm_to_vmem [thread:$0]  %s11, 512, %s59, [#allocation8], 64, 64, 4
    $region49: #{cnn_forward.1} parent=1 // pred_fallthru
      _
    // Predicated region
    $region50: #{cnn_forward.1} parent=1 // pred_check
      _
    $region51: #{cnn_forward.1} parent=1 // pred_check_branch
      %66 = sbr.rel (0) target = $region53
    $region52: #{cnn_forward.1} parent=1 // pred_region
      _
    $region53: #{cnn_forward.1} parent=1 // pred_fallthru
      _
    // Predicated region
    $region54: #{cnn_forward.1} parent=1 // pred_check
      _
    $region55: #{cnn_forward.1} parent=1 // pred_check_branch
      %68 = sbr.rel (0) target = $region57
    $region56: #{cnn_forward.1} parent=1 // pred_region
      %69 = dma.done [#allocation5], 4096
    $region57: #{cnn_forward.1} parent=1 // pred_fallthru
      _
    // Predicated region
    $region58: #{cnn_forward.1} parent=1 // pred_check
      _
    $region59: #{cnn_forward.1} parent=1 // pred_check_branch
      %71 = sbr.rel (0) target = $region61
    $region60: #{cnn_forward.1} parent=1 // pred_region
      %72 = dma.done [#allocation8], 512
    $region61: #{cnn_forward.1} parent=1 // pred_fallthru
      _
    %v74 = vld [vmem:[%s0] sm:$0xf]
    %v75 = vld [vmem:[%s0 + $0x4] sm:$0xf]
    %v76 = vld [vmem:[%s0 + $0x8] sm:$0xf]
    %v77 = vld [vmem:[%s0 + $0xc] sm:$0xf]
    %v78 = vld [vmem:[%s1] sm:$0xff]
    %v79 = vld [vmem:[%s1 + $0x8] sm:$0xff]
    %v80 = vld [vmem:[%s1 + $0x10] sm:$0xff]
    %v81 = vld [vmem:[%s1 + $0x18] sm:$0xff]
    %v82 = vld [vmem:[%s1 + $0x20] sm:$0xff]
    %v83 = vld [vmem:[%s1 + $0x28] sm:$0xff]
    %v84 = vld [vmem:[%s1 + $0x30] sm:$0xff]
    %v85 = vld [vmem:[%s1 + $0x38] sm:$0xff]
    %v86 = vld [vmem:[%s2] sm:$0x3]
    %v88 = vlaneseq
    %v89 = vshrl.u32 %v88, 7
    %v90 = vsub.s32 0, %v89
    %v91 = vrot.slane %v86, %v90
    %v92 = vlaneseq
    %v93 = vshrl.u32 %v92, 7
    %v94 = vsub.s32 1, %v93
    %v95 = vrot.slane %v86, %v94
    %v102 = vunpack.c.l.b16 %v74
    %v103 = vunpack.c.l.b16 %v75
    %v104 = vunpack.c.l.b16 %v76
    %v105 = vunpack.c.l.b16 %v77
    %v106 = vpack.c.b16 %v103, %v102
    %v107 = vpack.c.b16 %v105, %v104
    %v116 = vunpack.c.l.b16 %v78
    %v117 = vunpack.c.h.b16 %v78
    %v118 = vunpack.c.l.b16 %v79
    %v119 = vunpack.c.h.b16 %v79
    %v120 = vunpack.c.l.b16 %v80
    %v121 = vunpack.c.h.b16 %v80
    %v122 = vunpack.c.l.b16 %v81
    %v123 = vunpack.c.h.b16 %v81
    %v124 = vunpack.c.l.b16 %v82
    %v125 = vunpack.c.h.b16 %v82
    %v126 = vunpack.c.l.b16 %v83
    %v127 = vunpack.c.h.b16 %v83
    %v128 = vunpack.c.l.b16 %v84
    %v129 = vunpack.c.h.b16 %v84
    %v130 = vunpack.c.l.b16 %v85
    %v131 = vunpack.c.h.b16 %v85
    %v132 = vpack.c.b16 %v118, %v116
    %v133 = vpack.c.b16 %v119, %v117
    %v134 = vpack.c.b16 %v122, %v120
    %v135 = vpack.c.b16 %v123, %v121
    %v136 = vpack.c.b16 %v126, %v124
    %v137 = vpack.c.b16 %v127, %v125
    %v138 = vpack.c.b16 %v130, %v128
    %v139 = vpack.c.b16 %v131, %v129
    %vm148 = vcmask 523264
    %v150 = vsel %vm148, %v106, 0
    %v153 = vsel %vm148, %v107, 0
    %155 = vmatprep.subr.bf16.mxu0 %v133
    %156 = vmatpush1.bf16.msra.mxu0 %v132
    %157 = vmatprep.subr.bf16.mxu0 %v135
    %158 = vmatpush1.bf16.msra.mxu0 %v134
    %159 = vmatprep.subr.bf16.mxu0 %v137
    %160 = vmatpush1.bf16.msra.mxu0 %v136
    %161 = vmatprep.subr.bf16.mxu0 %v139
    %162 = vmatpush1.bf16.msra.mxu0 %v138
    %163 = vmatprep.subr.bf16.mxu0 0
    %164 = vmatpush1.bf16.msra.mxu0 0
    %165 = vmatprep.subr.bf16.mxu0 0
    %166 = vmatpush1.bf16.msra.mxu0 0
    %167 = vmatprep.subr.bf16.mxu0 0
    %168 = vmatpush1.bf16.msra.mxu0 0
    %169 = vmatprep.subr.bf16.mxu0 0
    %170 = vmatpush1.bf16.msra.mxu0 0
    %171 = vmatprep.subr.bf16.mxu0 0
    %172 = vmatpush1.bf16.msra.mxu0 0
    %173 = vmatprep.subr.bf16.mxu0 0
    %174 = vmatpush1.bf16.msra.mxu0 0
    %175 = vmatprep.subr.bf16.mxu0 0
    %176 = vmatpush1.bf16.msra.mxu0 0
    %177 = vmatprep.subr.bf16.mxu0 0
    %178 = vmatpush1.bf16.msra.mxu0 0
    %179 = vmatprep.subr.bf16.mxu0 0
    %180 = vmatpush1.bf16.msra.mxu0 0
    %181 = vmatprep.subr.bf16.mxu0 0
    %182 = vmatpush1.bf16.msra.mxu0 0
    %183 = vmatprep.subr.bf16.mxu0 0
    %184 = vmatpush1.bf16.msra.mxu0 0
    %185 = vmatprep.subr.bf16.mxu0 0
    %186 = vmatpush1.bf16.msra.mxu0 0
    %187 = vmatprep.mubr.bf16.mxu0 0
    %188 = vmatmul.mubr.bf16.gmra.mrb[0].mxu0 %v150
    %v189 = vpop.f32.mrb[0].mxu0
    %v190 = vadd.f32 %v91, %v189
    %v191 = vpop.f32.mrb[0].mxu0
    %v192 = vadd.f32 %v95, %v191
    %v193 = vpop.f32.mrb[0].mxu0
    %v194 = vadd.f32 %v91, %v193
    %v195 = vpop.f32.mrb[0].mxu0
    %v196 = vadd.f32 %v95, %v195
    %197 = vmatprep.mubr.bf16.mxu0 0
    %198 = vmatmul.mubr.bf16.gmra.mrb[0].mxu0 %v153
    %v199 = vpop.f32.mrb[0].mxu0
    %v200 = vadd.f32 %v91, %v199
    %v201 = vpop.f32.mrb[0].mxu0
    %v202 = vadd.f32 %v95, %v201
    %v203 = vpop.f32.mrb[0].mxu0
    %v204 = vadd.f32 %v91, %v203
    %v205 = vpop.f32.mrb[0].mxu0
    %v206 = vadd.f32 %v95, %v205
    %207 = vdwg.mxu0
    %v208 = vmax.f32 %v190, 0.0
    %v209 = vmax.f32 %v192, 0.0
    %v210 = vmax.f32 %v194, 0.0
    %v211 = vmax.f32 %v196, 0.0
    %v212 = vmax.f32 %v200, 0.0
    %v213 = vmax.f32 %v202, 0.0
    %v214 = vmax.f32 %v204, 0.0
    %v215 = vmax.f32 %v206, 0.0
    %v216 = vmax.f32 %v208, %v212
    %v217 = vmax.f32 %v209, %v213
    %v218 = vmax.f32 %v210, %v214
    %v219 = vmax.f32 %v211, %v215
    %v220 = vmax.f32 %v216, %v217
    %v221 = vmax.f32 %v218, %v219
    %222 = vst [vmem:[#allocation2] sm:$0x1] 0.0
    %223 = vst [vmem:[#allocation2 + $0x11] sm:$0x1] 0.0
    %224 = vst [vmem:[#allocation2 + $0x1] sm:$0xff] %v220
    %225 = vst [vmem:[#allocation2 + $0x9] sm:$0xff] %v221
    %v226 = vld [vmem:[#allocation2] sm:$0xff]
    %v227 = vld [vmem:[#allocation2 + $0x8] sm:$0xff]
    %v228 = vld [vmem:[%s3] sm:$0xff]
    %v229 = vld [vmem:[%s3 + $0x8] sm:$0xff]
    %231 = vset.pattern.permute.xlu0 0
    %232 = vperm.xlu0 %231, %v228
    %v233 = vpop.permute.xlu0 %232
    %236 = vset.pattern.permute.xlu0 0
    %237 = vperm.xlu0 %236, %v229
    %v238 = vpop.permute.xlu0 %237
    %v240 = vmul.f32 %v226, %v233
    %v241 = vmul.f32 %v227, %v238
    %v242 = vld [vmem:[#allocation2 + $0x1] sm:$0xff]
    %v243 = vld [vmem:[#allocation2 + $0x9] sm:$0xff]
    %v244 = vld [vmem:[#allocation2 + $0x2] sm:$0xff]
    %v245 = vld [vmem:[#allocation2 + $0xa] sm:$0xff]
    %v246 = vld [vmem:[%s4] sm:$0xff]
    %v247 = vld [vmem:[%s4 + $0x8] sm:$0xff]
    %249 = vset.pattern.permute.xlu0 0
    %250 = vperm.xlu0 %249, %v246
    %v251 = vpop.permute.xlu0 %250
    %254 = vset.pattern.permute.xlu0 0
    %255 = vperm.xlu0 %254, %v247
    %v256 = vpop.permute.xlu0 %255
    %v258 = vmul.f32 %v244, %v251
    %v259 = vmul.f32 %v245, %v256
    %v260 = vpack.c.bf16 %v241, %v240
    %v261 = vpack.c.bf16 %v243, %v242
    %v262 = vpack.c.bf16 %v259, %v258
    %v263 = vld [vmem:[%s5] sm:$0xff]
    %v264 = vld [vmem:[%s5 + $0x8] sm:$0xff]
    %v265 = vld [vmem:[%s5 + $0x10] sm:$0xff]
    %v266 = vld [vmem:[%s5 + $0x18] sm:$0xff]
    %v267 = vld [vmem:[%s5 + $0x20] sm:$0xff]
    %v268 = vld [vmem:[%s5 + $0x28] sm:$0xff]
    %v269 = vld [vmem:[%s5 + $0x30] sm:$0xff]
    %v270 = vld [vmem:[%s5 + $0x38] sm:$0xff]
    %v271 = vld [vmem:[%s5 + $0x40] sm:$0xff]
    %v272 = vld [vmem:[%s5 + $0x48] sm:$0xff]
    %v273 = vld [vmem:[%s5 + $0x50] sm:$0xff]
    %v274 = vld [vmem:[%s5 + $0x58] sm:$0xff]
    %v275 = vld [vmem:[%s5 + $0x60] sm:$0xff]
    %v276 = vld [vmem:[%s5 + $0x68] sm:$0xff]
    %v277 = vld [vmem:[%s5 + $0x70] sm:$0xff]
    %v278 = vld [vmem:[%s5 + $0x78] sm:$0xff]
    %v279 = vld [vmem:[%s5 + $0x80] sm:$0xff]
    %v280 = vld [vmem:[%s5 + $0x88] sm:$0xff]
    %v281 = vld [vmem:[%s5 + $0x90] sm:$0xff]
    %v282 = vld [vmem:[%s5 + $0x98] sm:$0xff]
    %v283 = vld [vmem:[%s5 + $0xa0] sm:$0xff]
    %v284 = vld [vmem:[%s5 + $0xa8] sm:$0xff]
    %v285 = vld [vmem:[%s5 + $0xb0] sm:$0xff]
    %v286 = vld [vmem:[%s5 + $0xb8] sm:$0xff]
    %v287 = vld [vmem:[%s5 + $0xc0] sm:$0xff]
    %v288 = vld [vmem:[%s5 + $0xc8] sm:$0xff]
    %v289 = vld [vmem:[%s5 + $0xd0] sm:$0xff]
    %v290 = vld [vmem:[%s5 + $0xd8] sm:$0xff]
    %v291 = vld [vmem:[%s5 + $0xe0] sm:$0xff]
    %v292 = vld [vmem:[%s5 + $0xe8] sm:$0xff]
    %v293 = vld [vmem:[%s5 + $0xf0] sm:$0xff]
    %v294 = vld [vmem:[%s5 + $0xf8] sm:$0xff]
    %v295 = vld [vmem:[%s5 + $0x100] sm:$0xff]
    %v296 = vld [vmem:[%s5 + $0x108] sm:$0xff]
    %v297 = vld [vmem:[%s5 + $0x110] sm:$0xff]
    %v298 = vld [vmem:[%s5 + $0x118] sm:$0xff]
    %v299 = vld [vmem:[%s5 + $0x120] sm:$0xff]
    %v300 = vld [vmem:[%s5 + $0x128] sm:$0xff]
    %v301 = vld [vmem:[%s5 + $0x130] sm:$0xff]
    %v302 = vld [vmem:[%s5 + $0x138] sm:$0xff]
    %v303 = vld [vmem:[%s5 + $0x140] sm:$0xff]
    %v304 = vld [vmem:[%s5 + $0x148] sm:$0xff]
    %v305 = vld [vmem:[%s5 + $0x150] sm:$0xff]
    %v306 = vld [vmem:[%s5 + $0x158] sm:$0xff]
    %v307 = vld [vmem:[%s5 + $0x160] sm:$0xff]
    %v308 = vld [vmem:[%s5 + $0x168] sm:$0xff]
    %v309 = vld [vmem:[%s5 + $0x170] sm:$0xff]
    %v310 = vld [vmem:[%s5 + $0x178] sm:$0xff]
    %v311 = vld [vmem:[%s6] sm:$0x3]
    %v313 = vlaneseq
    %v314 = vshrl.u32 %v313, 7
    %v315 = vsub.s32 0, %v314
    %v316 = vrot.slane %v311, %v315
    %v317 = vlaneseq
    %v318 = vshrl.u32 %v317, 7
    %v319 = vsub.s32 1, %v318
    %v320 = vrot.slane %v311, %v319
    %v371 = vunpack.c.l.b16 %v263
    %v372 = vunpack.c.h.b16 %v263
    %v373 = vunpack.c.l.b16 %v264
    %v374 = vunpack.c.h.b16 %v264
    %v375 = vunpack.c.l.b16 %v265
    %v376 = vunpack.c.h.b16 %v265
    %v377 = vunpack.c.l.b16 %v266
    %v378 = vunpack.c.h.b16 %v266
    %v379 = vunpack.c.l.b16 %v267
    %v380 = vunpack.c.h.b16 %v267
    %v381 = vunpack.c.l.b16 %v268
    %v382 = vunpack.c.h.b16 %v268
    %v383 = vunpack.c.l.b16 %v269
    %v384 = vunpack.c.h.b16 %v269
    %v385 = vunpack.c.l.b16 %v270
    %v386 = vunpack.c.h.b16 %v270
    %v387 = vunpack.c.l.b16 %v271
    %v388 = vunpack.c.h.b16 %v271
    %v389 = vunpack.c.l.b16 %v272
    %v390 = vunpack.c.h.b16 %v272
    %v391 = vunpack.c.l.b16 %v273
    %v392 = vunpack.c.h.b16 %v273
    %v393 = vunpack.c.l.b16 %v274
    %v394 = vunpack.c.h.b16 %v274
    %v395 = vunpack.c.l.b16 %v275
    %v396 = vunpack.c.h.b16 %v275
    %v397 = vunpack.c.l.b16 %v276
    %v398 = vunpack.c.h.b16 %v276
    %v399 = vunpack.c.l.b16 %v277
    %v400 = vunpack.c.h.b16 %v277
    %v401 = vunpack.c.l.b16 %v278
    %v402 = vunpack.c.h.b16 %v278
    %v403 = vunpack.c.l.b16 %v279
    %v404 = vunpack.c.h.b16 %v279
    %v405 = vunpack.c.l.b16 %v280
    %v406 = vunpack.c.h.b16 %v280
    %v407 = vunpack.c.l.b16 %v281
    %v408 = vunpack.c.h.b16 %v281
    %v409 = vunpack.c.l.b16 %v282
    %v410 = vunpack.c.h.b16 %v282
    %v411 = vunpack.c.l.b16 %v283
    %v412 = vunpack.c.h.b16 %v283
    %v413 = vunpack.c.l.b16 %v284
    %v414 = vunpack.c.h.b16 %v284
    %v415 = vunpack.c.l.b16 %v285
    %v416 = vunpack.c.h.b16 %v285
    %v417 = vunpack.c.l.b16 %v286
    %v418 = vunpack.c.h.b16 %v286
    %v419 = vunpack.c.l.b16 %v287
    %v420 = vunpack.c.h.b16 %v287
    %v421 = vunpack.c.l.b16 %v288
    %v422 = vunpack.c.h.b16 %v288
    %v423 = vunpack.c.l.b16 %v289
    %v424 = vunpack.c.h.b16 %v289
    %v425 = vunpack.c.l.b16 %v290
    %v426 = vunpack.c.h.b16 %v290
    %v427 = vunpack.c.l.b16 %v291
    %v428 = vunpack.c.h.b16 %v291
    %v429 = vunpack.c.l.b16 %v292
    %v430 = vunpack.c.h.b16 %v292
    %v431 = vunpack.c.l.b16 %v293
    %v432 = vunpack.c.h.b16 %v293
    %v433 = vunpack.c.l.b16 %v294
    %v434 = vunpack.c.h.b16 %v294
    %v435 = vunpack.c.l.b16 %v295
    %v436 = vunpack.c.h.b16 %v295
    %v437 = vunpack.c.l.b16 %v296
    %v438 = vunpack.c.h.b16 %v296
    %v439 = vunpack.c.l.b16 %v297
    %v440 = vunpack.c.h.b16 %v297
    %v441 = vunpack.c.l.b16 %v298
    %v442 = vunpack.c.h.b16 %v298
    %v443 = vunpack.c.l.b16 %v299
    %v444 = vunpack.c.h.b16 %v299
    %v445 = vunpack.c.l.b16 %v300
    %v446 = vunpack.c.h.b16 %v300
    %v447 = vunpack.c.l.b16 %v301
    %v448 = vunpack.c.h.b16 %v301
    %v449 = vunpack.c.l.b16 %v302
    %v450 = vunpack.c.h.b16 %v302
    %v451 = vunpack.c.l.b16 %v303
    %v452 = vunpack.c.h.b16 %v303
    %v453 = vunpack.c.l.b16 %v304
    %v454 = vunpack.c.h.b16 %v304
    %v455 = vunpack.c.l.b16 %v305
    %v456 = vunpack.c.h.b16 %v305
    %v457 = vunpack.c.l.b16 %v306
    %v458 = vunpack.c.h.b16 %v306
    %v459 = vunpack.c.l.b16 %v307
    %v460 = vunpack.c.h.b16 %v307
    %v461 = vunpack.c.l.b16 %v308
    %v462 = vunpack.c.h.b16 %v308
    %v463 = vunpack.c.l.b16 %v309
    %v464 = vunpack.c.h.b16 %v309
    %v465 = vunpack.c.l.b16 %v310
    %v466 = vunpack.c.h.b16 %v310
    %v467 = vpack.c.b16 %v373, %v371
    %v468 = vpack.c.b16 %v374, %v372
    %v469 = vpack.c.b16 %v377, %v375
    %v470 = vpack.c.b16 %v378, %v376
    %v471 = vpack.c.b16 %v381, %v379
    %v472 = vpack.c.b16 %v382, %v380
    %v473 = vpack.c.b16 %v385, %v383
    %v474 = vpack.c.b16 %v386, %v384
    %v475 = vpack.c.b16 %v389, %v387
    %v476 = vpack.c.b16 %v390, %v388
    %v477 = vpack.c.b16 %v393, %v391
    %v478 = vpack.c.b16 %v394, %v392
    %v479 = vpack.c.b16 %v397, %v395
    %v480 = vpack.c.b16 %v398, %v396
    %v481 = vpack.c.b16 %v401, %v399
    %v482 = vpack.c.b16 %v402, %v400
    %v483 = vpack.c.b16 %v405, %v403
    %v484 = vpack.c.b16 %v406, %v404
    %v485 = vpack.c.b16 %v409, %v407
    %v486 = vpack.c.b16 %v410, %v408
    %v487 = vpack.c.b16 %v413, %v411
    %v488 = vpack.c.b16 %v414, %v412
    %v489 = vpack.c.b16 %v417, %v415
    %v490 = vpack.c.b16 %v418, %v416
    %v491 = vpack.c.b16 %v421, %v419
    %v492 = vpack.c.b16 %v422, %v420
    %v493 = vpack.c.b16 %v425, %v423
    %v494 = vpack.c.b16 %v426, %v424
    %v495 = vpack.c.b16 %v429, %v427
    %v496 = vpack.c.b16 %v430, %v428
    %v497 = vpack.c.b16 %v433, %v431
    %v498 = vpack.c.b16 %v434, %v432
    %v499 = vpack.c.b16 %v437, %v435
    %v500 = vpack.c.b16 %v438, %v436
    %v501 = vpack.c.b16 %v441, %v439
    %v502 = vpack.c.b16 %v442, %v440
    %v503 = vpack.c.b16 %v445, %v443
    %v504 = vpack.c.b16 %v446, %v444
    %v505 = vpack.c.b16 %v449, %v447
    %v506 = vpack.c.b16 %v450, %v448
    %v507 = vpack.c.b16 %v453, %v451
    %v508 = vpack.c.b16 %v454, %v452
    %v509 = vpack.c.b16 %v457, %v455
    %v510 = vpack.c.b16 %v458, %v456
    %v511 = vpack.c.b16 %v461, %v459
    %v512 = vpack.c.b16 %v462, %v460
    %v513 = vpack.c.b16 %v465, %v463
    %v514 = vpack.c.b16 %v466, %v464
    %563 = vmatprep.subr.bf16.mxu0 %v468
    %564 = vmatpush1.bf16.msra.mxu0 %v467
    %565 = vmatprep.subr.bf16.mxu0 %v470
    %566 = vmatpush1.bf16.msra.mxu0 %v469
    %567 = vmatprep.subr.bf16.mxu0 %v472
    %568 = vmatpush1.bf16.msra.mxu0 %v471
    %569 = vmatprep.subr.bf16.mxu0 %v474
    %570 = vmatpush1.bf16.msra.mxu0 %v473
    %571 = vmatprep.subr.bf16.mxu0 %v476
    %572 = vmatpush1.bf16.msra.mxu0 %v475
    %573 = vmatprep.subr.bf16.mxu0 %v478
    %574 = vmatpush1.bf16.msra.mxu0 %v477
    %575 = vmatprep.subr.bf16.mxu0 %v480
    %576 = vmatpush1.bf16.msra.mxu0 %v479
    %577 = vmatprep.subr.bf16.mxu0 %v482
    %578 = vmatpush1.bf16.msra.mxu0 %v481
    %579 = vmatprep.subr.bf16.mxu0 %v484
    %580 = vmatpush1.bf16.msra.mxu0 %v483
    %581 = vmatprep.subr.bf16.mxu0 %v486
    %582 = vmatpush1.bf16.msra.mxu0 %v485
    %583 = vmatprep.subr.bf16.mxu0 %v488
    %584 = vmatpush1.bf16.msra.mxu0 %v487
    %585 = vmatprep.subr.bf16.mxu0 %v490
    %586 = vmatpush1.bf16.msra.mxu0 %v489
    %587 = vmatprep.subr.bf16.mxu0 %v492
    %588 = vmatpush1.bf16.msra.mxu0 %v491
    %589 = vmatprep.subr.bf16.mxu0 %v494
    %590 = vmatpush1.bf16.msra.mxu0 %v493
    %591 = vmatprep.subr.bf16.mxu0 %v496
    %592 = vmatpush1.bf16.msra.mxu0 %v495
    %593 = vmatprep.subr.bf16.mxu0 %v498
    %594 = vmatpush1.bf16.msra.mxu0 %v497
    %595 = vmatprep.mubr.bf16.mxu0 %v261
    %596 = vmatmul.mubr.bf16.gmra.mrb[0].mxu0 %v260
    %v597 = vpop.f32.mrb[0].mxu0
    %v598 = vadd.f32 %v316, %v597
    %v599 = vpop.f32.mrb[0].mxu0
    %v600 = vadd.f32 %v320, %v599
    %v601 = vpop.f32.mrb[0].mxu0
    %v602 = vadd.f32 %v316, %v601
    %v603 = vpop.f32.mrb[0].mxu0
    %v604 = vadd.f32 %v320, %v603
    %605 = vdwg.mxu0
    %606 = vmatprep.subr.bf16.mxu0 %v500
    %607 = vmatpush1.bf16.msra.mxu0 %v499
    %608 = vmatprep.subr.bf16.mxu0 %v502
    %609 = vmatpush1.bf16.msra.mxu0 %v501
    %610 = vmatprep.subr.bf16.mxu0 %v504
    %611 = vmatpush1.bf16.msra.mxu0 %v503
    %612 = vmatprep.subr.bf16.mxu0 %v506
    %613 = vmatpush1.bf16.msra.mxu0 %v505
    %614 = vmatprep.subr.bf16.mxu0 %v508
    %615 = vmatpush1.bf16.msra.mxu0 %v507
    %616 = vmatprep.subr.bf16.mxu0 %v510
    %617 = vmatpush1.bf16.msra.mxu0 %v509
    %618 = vmatprep.subr.bf16.mxu0 %v512
    %619 = vmatpush1.bf16.msra.mxu0 %v511
    %620 = vmatprep.subr.bf16.mxu0 %v514
    %621 = vmatpush1.bf16.msra.mxu0 %v513
    %622 = vmatprep.subr.bf16.mxu0 0
    %623 = vmatpush1.bf16.msra.mxu0 0
    %624 = vmatprep.subr.bf16.mxu0 0
    %625 = vmatpush1.bf16.msra.mxu0 0
    %626 = vmatprep.subr.bf16.mxu0 0
    %627 = vmatpush1.bf16.msra.mxu0 0
    %628 = vmatprep.subr.bf16.mxu0 0
    %629 = vmatpush1.bf16.msra.mxu0 0
    %630 = vmatprep.subr.bf16.mxu0 0
    %631 = vmatpush1.bf16.msra.mxu0 0
    %632 = vmatprep.subr.bf16.mxu0 0
    %633 = vmatpush1.bf16.msra.mxu0 0
    %634 = vmatprep.subr.bf16.mxu0 0
    %635 = vmatpush1.bf16.msra.mxu0 0
    %636 = vmatprep.subr.bf16.mxu0 0
    %637 = vmatpush1.bf16.msra.mxu0 0
    %638 = vmatprep.mubr.bf16.mxu0 0
    %639 = vmatmul.mubr.bf16.gmra.mrb[0].mxu0 %v262
    %v640 = vpop.f32.mrb[0].mxu0
    %v641 = vadd.f32 %v598, %v640
    %v642 = vpop.f32.mrb[0].mxu0
    %v643 = vadd.f32 %v600, %v642
    %v644 = vpop.f32.mrb[0].mxu0
    %v645 = vadd.f32 %v602, %v644
    %v646 = vpop.f32.mrb[0].mxu0
    %v647 = vadd.f32 %v604, %v646
    %648 = vdwg.mxu0
    %v649 = vmax.f32 %v641, 0.0
    %v650 = vmax.f32 %v643, 0.0
    %v651 = vmax.f32 %v645, 0.0
    %v652 = vmax.f32 %v647, 0.0
    %v653 = vmax.f32 %v649, %v650
    %v654 = vmax.f32 %v651, %v652
    %655 = vst [vmem:[#allocation3] sm:$0xff] %v653
    %656 = vst [vmem:[#allocation3 + $0x8] sm:$0xff] %v654
    %v657 = vld [vmem:[#allocation3] ss:$8 sm:$0x3]
    %s658 = scalar_lea.vmem [#allocation3], 1
    %v659 = vld [vmem:[%s658] ss:$8 sm:$0x3]
    %v660 = vmax.f32 %v657, %v659
    %s661 = scalar_lea.vmem [#allocation3], 2
    %v662 = vld [vmem:[%s661] ss:$8 sm:$0x3]
    %s663 = scalar_lea.vmem [#allocation3], 3
    %v664 = vld [vmem:[%s663] ss:$8 sm:$0x3]
    %v665 = vmax.f32 %v662, %v664
    %s666 = scalar_lea.vmem [#allocation3], 4
    %v667 = vld [vmem:[%s666] ss:$8 sm:$0x3]
    %s668 = scalar_lea.vmem [#allocation3], 5
    %v669 = vld [vmem:[%s668] ss:$8 sm:$0x3]
    %v670 = vmax.f32 %v667, %v669
    %s671 = scalar_lea.vmem [#allocation3], 6
    %v672 = vld [vmem:[%s671] ss:$8 sm:$0x3]
    %s673 = scalar_lea.vmem [#allocation3], 7
    %v674 = vld [vmem:[%s673] ss:$8 sm:$0x3]
    %v675 = vmax.f32 %v672, %v674
    %v676 = vpack.c.bf16 %v660, %v660
    %v677 = vpack.c.bf16 %v665, %v665
    %v678 = vpack.c.bf16 %v670, %v670
    %v679 = vpack.c.bf16 %v675, %v675
    %v680 = vld [vmem:[#allocation4] sm:$0xf]
    %v681 = vld [vmem:[#allocation4 + $0x4] sm:$0xf]
    %v682 = vld [vmem:[#allocation4 + $0x8] sm:$0xf]
    %v683 = vld [vmem:[#allocation4 + $0xc] sm:$0xf]
    %v684 = vld [vmem:[#allocation4 + $0x10] sm:$0xf]
    %v685 = vld [vmem:[#allocation4 + $0x14] sm:$0xf]
    %v686 = vld [vmem:[#allocation4 + $0x18] sm:$0xf]
    %v687 = vld [vmem:[#allocation4 + $0x1c] sm:$0xf]
    %v688 = vld [vmem:[#allocation4 + $0x20] sm:$0xf]
    %v689 = vld [vmem:[#allocation4 + $0x24] sm:$0xf]
    %v690 = vld [vmem:[#allocation4 + $0x28] sm:$0xf]
    %v691 = vld [vmem:[#allocation4 + $0x2c] sm:$0xf]
    %v692 = vld [vmem:[#allocation4 + $0x30] sm:$0xf]
    %v693 = vld [vmem:[#allocation4 + $0x34] sm:$0xf]
    %v694 = vld [vmem:[#allocation4 + $0x38] sm:$0xf]
    %v695 = vld [vmem:[#allocation4 + $0x3c] sm:$0xf]
    %v696 = vld [vmem:[#allocation4 + $0x40] sm:$0xf]
    %v697 = vld [vmem:[#allocation4 + $0x44] sm:$0xf]
    %v698 = vld [vmem:[#allocation4 + $0x48] sm:$0xf]
    %v699 = vld [vmem:[#allocation4 + $0x4c] sm:$0xf]
    %v700 = vld [vmem:[#allocation4 + $0x50] sm:$0xf]
    %v701 = vld [vmem:[#allocation4 + $0x54] sm:$0xf]
    %v702 = vld [vmem:[#allocation4 + $0x58] sm:$0xf]
    %v703 = vld [vmem:[#allocation4 + $0x5c] sm:$0xf]
    %v704 = vld [vmem:[#allocation4 + $0x60] sm:$0xf]
    %v705 = vld [vmem:[#allocation4 + $0x64] sm:$0xf]
    %v706 = vld [vmem:[#allocation4 + $0x68] sm:$0xf]
    %v707 = vld [vmem:[#allocation4 + $0x6c] sm:$0xf]
    %v708 = vld [vmem:[#allocation4 + $0x70] sm:$0xf]
    %v709 = vld [vmem:[#allocation4 + $0x74] sm:$0xf]
    %v710 = vld [vmem:[#allocation4 + $0x78] sm:$0xf]
    %v711 = vld [vmem:[#allocation4 + $0x7c] sm:$0xf]
    %v712 = vld [vmem:[#allocation4 + $0x80] sm:$0xf]
    %v713 = vld [vmem:[#allocation4 + $0x84] sm:$0xf]
    %v714 = vld [vmem:[#allocation4 + $0x88] sm:$0xf]
    %v715 = vld [vmem:[#allocation4 + $0x8c] sm:$0xf]
    %v716 = vld [vmem:[#allocation4 + $0x90] sm:$0xf]
    %v717 = vld [vmem:[#allocation4 + $0x94] sm:$0xf]
    %v718 = vld [vmem:[#allocation4 + $0x98] sm:$0xf]
    %v719 = vld [vmem:[#allocation4 + $0x9c] sm:$0xf]
    %v720 = vld [vmem:[#allocation4 + $0xa0] sm:$0xf]
    %v721 = vld [vmem:[#allocation4 + $0xa4] sm:$0xf]
    %v722 = vld [vmem:[#allocation4 + $0xa8] sm:$0xf]
    %v723 = vld [vmem:[#allocation4 + $0xac] sm:$0xf]
    %v724 = vld [vmem:[#allocation4 + $0xb0] sm:$0xf]
    %v725 = vld [vmem:[#allocation4 + $0xb4] sm:$0xf]
    %v726 = vld [vmem:[#allocation4 + $0xb8] sm:$0xf]
    %v727 = vld [vmem:[#allocation4 + $0xbc] sm:$0xf]
    %v728 = vld [vmem:[#allocation4 + $0xc0] sm:$0xf]
    %v729 = vld [vmem:[#allocation4 + $0xc4] sm:$0xf]
    %v730 = vld [vmem:[#allocation4 + $0xc8] sm:$0xf]
    %v731 = vld [vmem:[#allocation4 + $0xcc] sm:$0xf]
    %v732 = vld [vmem:[#allocation4 + $0xd0] sm:$0xf]
    %v733 = vld [vmem:[#allocation4 + $0xd4] sm:$0xf]
    %v734 = vld [vmem:[#allocation4 + $0xd8] sm:$0xf]
    %v735 = vld [vmem:[#allocation4 + $0xdc] sm:$0xf]
    %v736 = vld [vmem:[#allocation4 + $0xe0] sm:$0xf]
    %v737 = vld [vmem:[#allocation4 + $0xe4] sm:$0xf]
    %v738 = vld [vmem:[#allocation4 + $0xe8] sm:$0xf]
    %v739 = vld [vmem:[#allocation4 + $0xec] sm:$0xf]
    %v740 = vld [vmem:[#allocation4 + $0xf0] sm:$0xf]
    %v741 = vld [vmem:[#allocation4 + $0xf4] sm:$0xf]
    %v742 = vld [vmem:[#allocation4 + $0xf8] sm:$0xf]
    %v743 = vld [vmem:[#allocation4 + $0xfc] sm:$0xf]
    %v744 = vld [vmem:[%s8] sm:$0x1]
    %v746 = vlaneseq
    %v747 = vshrl.u32 %v746, 7
    %v748 = vsub.s32 0, %v747
    %v749 = vrot.slane %v744, %v748
    %v815 = vunpack.c.l.b16 %v680
    %v816 = vunpack.c.l.b16 %v681
    %v817 = vunpack.c.l.b16 %v682
    %v818 = vunpack.c.l.b16 %v683
    %v819 = vunpack.c.l.b16 %v684
    %v820 = vunpack.c.l.b16 %v685
    %v821 = vunpack.c.l.b16 %v686
    %v822 = vunpack.c.l.b16 %v687
    %v823 = vunpack.c.l.b16 %v688
    %v824 = vunpack.c.l.b16 %v689
    %v825 = vunpack.c.l.b16 %v690
    %v826 = vunpack.c.l.b16 %v691
    %v827 = vunpack.c.l.b16 %v692
    %v828 = vunpack.c.l.b16 %v693
    %v829 = vunpack.c.l.b16 %v694
    %v830 = vunpack.c.l.b16 %v695
    %v831 = vunpack.c.l.b16 %v696
    %v832 = vunpack.c.l.b16 %v697
    %v833 = vunpack.c.l.b16 %v698
    %v834 = vunpack.c.l.b16 %v699
    %v835 = vunpack.c.l.b16 %v700
    %v836 = vunpack.c.l.b16 %v701
    %v837 = vunpack.c.l.b16 %v702
    %v838 = vunpack.c.l.b16 %v703
    %v839 = vunpack.c.l.b16 %v704
    %v840 = vunpack.c.l.b16 %v705
    %v841 = vunpack.c.l.b16 %v706
    %v842 = vunpack.c.l.b16 %v707
    %v843 = vunpack.c.l.b16 %v708
    %v844 = vunpack.c.l.b16 %v709
    %v845 = vunpack.c.l.b16 %v710
    %v846 = vunpack.c.l.b16 %v711
    %v847 = vunpack.c.l.b16 %v712
    %v848 = vunpack.c.l.b16 %v713
    %v849 = vunpack.c.l.b16 %v714
    %v850 = vunpack.c.l.b16 %v715
    %v851 = vunpack.c.l.b16 %v716
    %v852 = vunpack.c.l.b16 %v717
    %v853 = vunpack.c.l.b16 %v718
    %v854 = vunpack.c.l.b16 %v719
    %v855 = vunpack.c.l.b16 %v720
    %v856 = vunpack.c.l.b16 %v721
    %v857 = vunpack.c.l.b16 %v722
    %v858 = vunpack.c.l.b16 %v723
    %v859 = vunpack.c.l.b16 %v724
    %v860 = vunpack.c.l.b16 %v725
    %v861 = vunpack.c.l.b16 %v726
    %v862 = vunpack.c.l.b16 %v727
    %v863 = vunpack.c.l.b16 %v728
    %v864 = vunpack.c.l.b16 %v729
    %v865 = vunpack.c.l.b16 %v730
    %v866 = vunpack.c.l.b16 %v731
    %v867 = vunpack.c.l.b16 %v732
    %v868 = vunpack.c.l.b16 %v733
    %v869 = vunpack.c.l.b16 %v734
    %v870 = vunpack.c.l.b16 %v735
    %v871 = vunpack.c.l.b16 %v736
    %v872 = vunpack.c.l.b16 %v737
    %v873 = vunpack.c.l.b16 %v738
    %v874 = vunpack.c.l.b16 %v739
    %v875 = vunpack.c.l.b16 %v740
    %v876 = vunpack.c.l.b16 %v741
    %v877 = vunpack.c.l.b16 %v742
    %v878 = vunpack.c.l.b16 %v743
    %v879 = vpack.c.b16 %v816, %v815
    %v880 = vpack.c.b16 %v818, %v817
    %v881 = vpack.c.b16 %v820, %v819
    %v882 = vpack.c.b16 %v822, %v821
    %v883 = vpack.c.b16 %v824, %v823
    %v884 = vpack.c.b16 %v826, %v825
    %v885 = vpack.c.b16 %v828, %v827
    %v886 = vpack.c.b16 %v830, %v829
    %v887 = vpack.c.b16 %v832, %v831
    %v888 = vpack.c.b16 %v834, %v833
    %v889 = vpack.c.b16 %v836, %v835
    %v890 = vpack.c.b16 %v838, %v837
    %v891 = vpack.c.b16 %v840, %v839
    %v892 = vpack.c.b16 %v842, %v841
    %v893 = vpack.c.b16 %v844, %v843
    %v894 = vpack.c.b16 %v846, %v845
    %v895 = vpack.c.b16 %v848, %v847
    %v896 = vpack.c.b16 %v850, %v849
    %v897 = vpack.c.b16 %v852, %v851
    %v898 = vpack.c.b16 %v854, %v853
    %v899 = vpack.c.b16 %v856, %v855
    %v900 = vpack.c.b16 %v858, %v857
    %v901 = vpack.c.b16 %v860, %v859
    %v902 = vpack.c.b16 %v862, %v861
    %v903 = vpack.c.b16 %v864, %v863
    %v904 = vpack.c.b16 %v866, %v865
    %v905 = vpack.c.b16 %v868, %v867
    %v906 = vpack.c.b16 %v870, %v869
    %v907 = vpack.c.b16 %v872, %v871
    %v908 = vpack.c.b16 %v874, %v873
    %v909 = vpack.c.b16 %v876, %v875
    %v910 = vpack.c.b16 %v878, %v877
    %943 = vmatprep.subr.bf16.mxu0 0
    %944 = vmatpush1.bf16.msra.mxu0 %v879
    %945 = vmatprep.subr.bf16.mxu0 0
    %946 = vmatpush1.bf16.msra.mxu0 %v880
    %947 = vmatprep.subr.bf16.mxu0 0
    %948 = vmatpush1.bf16.msra.mxu0 %v881
    %949 = vmatprep.subr.bf16.mxu0 0
    %950 = vmatpush1.bf16.msra.mxu0 %v882
    %951 = vmatprep.subr.bf16.mxu0 0
    %952 = vmatpush1.bf16.msra.mxu0 %v883
    %953 = vmatprep.subr.bf16.mxu0 0
    %954 = vmatpush1.bf16.msra.mxu0 %v884
    %955 = vmatprep.subr.bf16.mxu0 0
    %956 = vmatpush1.bf16.msra.mxu0 %v885
    %957 = vmatprep.subr.bf16.mxu0 0
    %958 = vmatpush1.bf16.msra.mxu0 %v886
    %959 = vmatprep.subr.bf16.mxu0 0
    %960 = vmatpush1.bf16.msra.mxu0 %v887
    %961 = vmatprep.subr.bf16.mxu0 0
    %962 = vmatpush1.bf16.msra.mxu0 %v888
    %963 = vmatprep.subr.bf16.mxu0 0
    %964 = vmatpush1.bf16.msra.mxu0 %v889
    %965 = vmatprep.subr.bf16.mxu0 0
    %966 = vmatpush1.bf16.msra.mxu0 %v890
    %967 = vmatprep.subr.bf16.mxu0 0
    %968 = vmatpush1.bf16.msra.mxu0 %v891
    %969 = vmatprep.subr.bf16.mxu0 0
    %970 = vmatpush1.bf16.msra.mxu0 %v892
    %971 = vmatprep.subr.bf16.mxu0 0
    %972 = vmatpush1.bf16.msra.mxu0 %v893
    %973 = vmatprep.subr.bf16.mxu0 0
    %974 = vmatpush1.bf16.msra.mxu0 %v894
    %975 = vmatprep.mubr.bf16.mxu0 %v677
    %976 = vmatmul.mubr.bf16.gmra.mrb[0].mxu0 %v676
    %v977 = vpop.f32.mrb[0].mxu0
    %v978 = vadd.f32 %v749, %v977
    %v979 = vpop.f32.mrb[0].mxu0
    %v980 = vpop.f32.mrb[0].mxu0
    %v981 = vpop.f32.mrb[0].mxu0
    %982 = vdwg.mxu0
    %983 = vmatprep.subr.bf16.mxu0 0
    %984 = vmatpush1.bf16.msra.mxu0 %v895
    %985 = vmatprep.subr.bf16.mxu0 0
    %986 = vmatpush1.bf16.msra.mxu0 %v896
    %987 = vmatprep.subr.bf16.mxu0 0
    %988 = vmatpush1.bf16.msra.mxu0 %v897
    %989 = vmatprep.subr.bf16.mxu0 0
    %990 = vmatpush1.bf16.msra.mxu0 %v898
    %991 = vmatprep.subr.bf16.mxu0 0
    %992 = vmatpush1.bf16.msra.mxu0 %v899
    %993 = vmatprep.subr.bf16.mxu0 0
    %994 = vmatpush1.bf16.msra.mxu0 %v900
    %995 = vmatprep.subr.bf16.mxu0 0
    %996 = vmatpush1.bf16.msra.mxu0 %v901
    %997 = vmatprep.subr.bf16.mxu0 0
    %998 = vmatpush1.bf16.msra.mxu0 %v902
    %999 = vmatprep.subr.bf16.mxu0 0
    %1000 = vmatpush1.bf16.msra.mxu0 %v903
    %1001 = vmatprep.subr.bf16.mxu0 0
    %1002 = vmatpush1.bf16.msra.mxu0 %v904
    %1003 = vmatprep.subr.bf16.mxu0 0
    %1004 = vmatpush1.bf16.msra.mxu0 %v905
    %1005 = vmatprep.subr.bf16.mxu0 0
    %1006 = vmatpush1.bf16.msra.mxu0 %v906
    %1007 = vmatprep.subr.bf16.mxu0 0
    %1008 = vmatpush1.bf16.msra.mxu0 %v907
    %1009 = vmatprep.subr.bf16.mxu0 0
    %1010 = vmatpush1.bf16.msra.mxu0 %v908
    %1011 = vmatprep.subr.bf16.mxu0 0
    %1012 = vmatpush1.bf16.msra.mxu0 %v909
    %1013 = vmatprep.subr.bf16.mxu0 0
    %1014 = vmatpush1.bf16.msra.mxu0 %v910
    %1015 = vmatprep.mubr.bf16.mxu0 %v679
    %1016 = vmatmul.mubr.bf16.gmra.mrb[0].mxu0 %v678
    %v1017 = vpop.f32.mrb[0].mxu0
    %v1018 = vadd.f32 %v978, %v1017
    %v1019 = vpop.f32.mrb[0].mxu0
    %v1020 = vpop.f32.mrb[0].mxu0
    %v1021 = vpop.f32.mrb[0].mxu0
    %1022 = vdwg.mxu0
    %v1023 = vmax.f32 %v1018, 0.0
    %v1024 = vpack.c.bf16 %v1023, %v1023
    %v1025 = vld [vmem:[%s9] sm:$0xf]
    %v1026 = vld [vmem:[%s9 + $0x4] sm:$0xf]
    %v1027 = vld [vmem:[%s9 + $0x8] sm:$0xf]
    %v1028 = vld [vmem:[%s9 + $0xc] sm:$0xf]
    %v1029 = vld [vmem:[%s9 + $0x10] sm:$0xf]
    %v1030 = vld [vmem:[%s9 + $0x14] sm:$0xf]
    %v1031 = vld [vmem:[%s9 + $0x18] sm:$0xf]
    %v1032 = vld [vmem:[%s9 + $0x1c] sm:$0xf]
    %v1033 = vld [vmem:[%s9 + $0x20] sm:$0xf]
    %v1034 = vld [vmem:[%s9 + $0x24] sm:$0xf]
    %v1035 = vld [vmem:[%s9 + $0x28] sm:$0xf]
    %v1036 = vld [vmem:[%s9 + $0x2c] sm:$0xf]
    %v1037 = vld [vmem:[%s9 + $0x30] sm:$0xf]
    %v1038 = vld [vmem:[%s9 + $0x34] sm:$0xf]
    %v1039 = vld [vmem:[%s9 + $0x38] sm:$0xf]
    %v1040 = vld [vmem:[%s9 + $0x3c] sm:$0xf]
    %v1041 = vld [vmem:[%s10] sm:$0x1]
    %v1043 = vlaneseq
    %v1044 = vshrl.u32 %v1043, 7
    %v1045 = vsub.s32 0, %v1044
    %v1046 = vrot.slane %v1041, %v1045
    %v1064 = vunpack.c.l.b16 %v1025
    %v1065 = vunpack.c.l.b16 %v1026
    %v1066 = vunpack.c.l.b16 %v1027
    %v1067 = vunpack.c.l.b16 %v1028
    %v1068 = vunpack.c.l.b16 %v1029
    %v1069 = vunpack.c.l.b16 %v1030
    %v1070 = vunpack.c.l.b16 %v1031
    %v1071 = vunpack.c.l.b16 %v1032
    %v1072 = vunpack.c.l.b16 %v1033
    %v1073 = vunpack.c.l.b16 %v1034
    %v1074 = vunpack.c.l.b16 %v1035
    %v1075 = vunpack.c.l.b16 %v1036
    %v1076 = vunpack.c.l.b16 %v1037
    %v1077 = vunpack.c.l.b16 %v1038
    %v1078 = vunpack.c.l.b16 %v1039
    %v1079 = vunpack.c.l.b16 %v1040
    %v1080 = vpack.c.b16 %v1065, %v1064
    %v1081 = vpack.c.b16 %v1067, %v1066
    %v1082 = vpack.c.b16 %v1069, %v1068
    %v1083 = vpack.c.b16 %v1071, %v1070
    %v1084 = vpack.c.b16 %v1073, %v1072
    %v1085 = vpack.c.b16 %v1075, %v1074
    %v1086 = vpack.c.b16 %v1077, %v1076
    %v1087 = vpack.c.b16 %v1079, %v1078
    %1096 = vmatprep.subr.bf16.mxu0 0
    %1097 = vmatpush1.bf16.msra.mxu0 %v1080
    %1098 = vmatprep.subr.bf16.mxu0 0
    %1099 = vmatpush1.bf16.msra.mxu0 %v1081
    %1100 = vmatprep.subr.bf16.mxu0 0
    %1101 = vmatpush1.bf16.msra.mxu0 %v1082
    %1102 = vmatprep.subr.bf16.mxu0 0
    %1103 = vmatpush1.bf16.msra.mxu0 %v1083
    %1104 = vmatprep.subr.bf16.mxu0 0
    %1105 = vmatpush1.bf16.msra.mxu0 %v1084
    %1106 = vmatprep.subr.bf16.mxu0 0
    %1107 = vmatpush1.bf16.msra.mxu0 %v1085
    %1108 = vmatprep.subr.bf16.mxu0 0
    %1109 = vmatpush1.bf16.msra.mxu0 %v1086
    %1110 = vmatprep.subr.bf16.mxu0 0
    %1111 = vmatpush1.bf16.msra.mxu0 %v1087
    %1112 = vmatprep.subr.bf16.mxu0 0
    %1113 = vmatpush1.bf16.msra.mxu0 0
    %1114 = vmatprep.subr.bf16.mxu0 0
    %1115 = vmatpush1.bf16.msra.mxu0 0
    %1116 = vmatprep.subr.bf16.mxu0 0
    %1117 = vmatpush1.bf16.msra.mxu0 0
    %1118 = vmatprep.subr.bf16.mxu0 0
    %1119 = vmatpush1.bf16.msra.mxu0 0
    %1120 = vmatprep.subr.bf16.mxu0 0
    %1121 = vmatpush1.bf16.msra.mxu0 0
    %1122 = vmatprep.subr.bf16.mxu0 0
    %1123 = vmatpush1.bf16.msra.mxu0 0
    %1124 = vmatprep.subr.bf16.mxu0 0
    %1125 = vmatpush1.bf16.msra.mxu0 0
    %1126 = vmatprep.subr.bf16.mxu0 0
    %1127 = vmatpush1.bf16.msra.mxu0 0
    %1128 = vmatprep.mubr.bf16.mxu0 0
    %1129 = vmatmul.mubr.bf16.gmra.mrb[0].mxu0 %v1024
    %v1130 = vpop.f32.mrb[0].mxu0
    %v1131 = vadd.f32 %v1046, %v1130
    %v1132 = vpop.f32.mrb[0].mxu0
    %v1133 = vpop.f32.mrb[0].mxu0
    %v1134 = vpop.f32.mrb[0].mxu0
    %1135 = vdwg.mxu0
    %v1136 = vmax.f32 %v1131, 0.0
    %v1137 = vpack.c.bf16 %v1136, %v1136
    %v1138 = vld [vmem:[#allocation7] sm:$0xf]
    %v1139 = vld [vmem:[#allocation7 + $0x4] sm:$0xf]
    %v1140 = vld [vmem:[#allocation7 + $0x8] sm:$0xf]
    %v1141 = vld [vmem:[#allocation7 + $0xc] sm:$0xf]
    %v1142 = vld [vmem:[#allocation7 + $0x10] sm:$0xf]
    %v1143 = vld [vmem:[#allocation7 + $0x14] sm:$0xf]
    %v1144 = vld [vmem:[#allocation7 + $0x18] sm:$0xf]
    %v1145 = vld [vmem:[#allocation7 + $0x1c] sm:$0xf]
    %v1146 = vld [vmem:[%s12] sm:$0x1]
    %v1148 = vlaneseq
    %v1149 = vshrl.u32 %v1148, 7
    %v1150 = vsub.s32 0, %v1149
    %v1151 = vrot.slane %v1146, %v1150
    %v1161 = vunpack.c.l.b16 %v1138
    %v1162 = vunpack.c.l.b16 %v1139
    %v1163 = vunpack.c.l.b16 %v1140
    %v1164 = vunpack.c.l.b16 %v1141
    %v1165 = vunpack.c.l.b16 %v1142
    %v1166 = vunpack.c.l.b16 %v1143
    %v1167 = vunpack.c.l.b16 %v1144
    %v1168 = vunpack.c.l.b16 %v1145
    %v1169 = vpack.c.b16 %v1162, %v1161
    %v1170 = vpack.c.b16 %v1164, %v1163
    %v1171 = vpack.c.b16 %v1166, %v1165
    %v1172 = vpack.c.b16 %v1168, %v1167
    %v1178 = vsel %vm148, %v1137, 0
    %1180 = vmatprep.subr.bf16.mxu0 0
    %1181 = vmatpush1.bf16.msra.mxu0 %v1169
    %1182 = vmatprep.subr.bf16.mxu0 0
    %1183 = vmatpush1.bf16.msra.mxu0 %v1170
    %1184 = vmatprep.subr.bf16.mxu0 0
    %1185 = vmatpush1.bf16.msra.mxu0 %v1171
    %1186 = vmatprep.subr.bf16.mxu0 0
    %1187 = vmatpush1.bf16.msra.mxu0 %v1172
    %1188 = vmatprep.subr.bf16.mxu0 0
    %1189 = vmatpush1.bf16.msra.mxu0 0
    %1190 = vmatprep.subr.bf16.mxu0 0
    %1191 = vmatpush1.bf16.msra.mxu0 0
    %1192 = vmatprep.subr.bf16.mxu0 0
    %1193 = vmatpush1.bf16.msra.mxu0 0
    %1194 = vmatprep.subr.bf16.mxu0 0
    %1195 = vmatpush1.bf16.msra.mxu0 0
    %1196 = vmatprep.subr.bf16.mxu0 0
    %1197 = vmatpush1.bf16.msra.mxu0 0
    %1198 = vmatprep.subr.bf16.mxu0 0
    %1199 = vmatpush1.bf16.msra.mxu0 0
    %1200 = vmatprep.subr.bf16.mxu0 0
    %1201 = vmatpush1.bf16.msra.mxu0 0
    %1202 = vmatprep.subr.bf16.mxu0 0
    %1203 = vmatpush1.bf16.msra.mxu0 0
    %1204 = vmatprep.subr.bf16.mxu0 0
    %1205 = vmatpush1.bf16.msra.mxu0 0
    %1206 = vmatprep.subr.bf16.mxu0 0
    %1207 = vmatpush1.bf16.msra.mxu0 0
    %1208 = vmatprep.subr.bf16.mxu0 0
    %1209 = vmatpush1.bf16.msra.mxu0 0
    %1210 = vmatprep.subr.bf16.mxu0 0
    %1211 = vmatpush1.bf16.msra.mxu0 0
    %1212 = vmatprep.mubr.bf16.mxu0 0
    %1213 = vmatmul.mubr.bf16.gmra.mrb[0].mxu0 %v1178
    %v1214 = vpop.f32.mrb[0].mxu0
    %v1215 = vadd.f32 %v1151, %v1214
    %v1216 = vpop.f32.mrb[0].mxu0
    %v1217 = vpop.f32.mrb[0].mxu0
    %v1218 = vpop.f32.mrb[0].mxu0
    %1219 = vdwg.mxu0
    %1220 = vst [vmem:[#allocation9] sm:$0x3] %v1215
    // Predicated region
    $region62: #{cnn_forward.1} parent=1 // pred_check
      _
    $region63: #{cnn_forward.1} parent=1 // pred_check_branch
      %1222 = sbr.rel (0) target = $region65
    $region64: #{cnn_forward.1} parent=1 // pred_region
      %s1224 = ssub.s32 32, 32
      %1225 = vsyncadd [#allocation6], %s1224
      %s1227 = sshll.u32 [#allocation9], 4
      %s1228 = int_to_ptr.vmem [resolvable:$true] %s1227
      %1230 = dma.vmem_to_hbm [thread:$0]  %s1228, 32, %s13, [#allocation6]
    $region65: #{cnn_forward.1} parent=1 // pred_fallthru
      _
    // Predicated region
    $region66: #{cnn_forward.1} parent=1 // pred_check
      _
    $region67: #{cnn_forward.1} parent=1 // pred_check_branch
      %1232 = sbr.rel (0) target = $region69
    $region68: #{cnn_forward.1} parent=1 // pred_region
      %1233 = dma.done [#allocation6], 32
    $region69: #{cnn_forward.1} parent=1 // pred_fallthru
      _
    %1234 = vsyncpa [#allocation5], 1
    %1235 = vsyncpa [#allocation8], 1
    %1236 = vsyncpa [#allocation6], 1

</llo_original>
